<compile_context>
chip_gen: v5e
topology: v5e:2x2
jax: 0.10.0
libtpu: 0.0.40
codegen_flags: <defaults>
</compile_context>

<pallas_src>
import jax
import jax.numpy as jnp
from jax import lax
from jax.experimental import pallas as pl
from jax.experimental.pallas import tpu as pltpu

# ---------------- config (mirrors Combine_Model_and_Loss.__init__) ----------
EMB_DIM = 2            # model's emb_2d channels
NUM_CLASSES = 8        # model's category_2d channels
MAX_INST = 8           # fixed cap on instance ids for NDPushPullLoss
POS_WEIGHT = 10.0      # BCEWithLogitsLoss(pos_weight=torch.tensor([10.0]))
IOU_SMOOTH = 1.0       # IoULoss smooth=1
VAR_W, DIST_W = 1.0, 1.0
MARGIN_VAR, MARGIN_DIST = 1.0, 5.0
IGNORE_CE = 255        # CrossEntropyLoss ignore_index
C_OUT_TOTAL = 1 + EMB_DIM + NUM_CLASSES
MAX_TP = 2048          # max pixels (lanes) per grid step

F32 = jnp.float32


# ============================= helpers =======================================

def _pick_tile(hw):
    tp = min(hw, MAX_TP)
    tp = ((tp + 127) // 128) * 128
    return max(tp, 128)


def _row_mask(k, tp, hw):
    # valid-pixel mask for (possibly ragged) tail tiles; pixels on lanes
    lane = lax.broadcasted_iota(jnp.int32, (1, tp), 1)
    return (k * tp + lane) < hw                      # (1, tp) bool


def _row_select(x, e):
    # row e of x (R, tp) as (1, tp) via mask+reduce (no unaligned slices)
    r = lax.broadcasted_iota(jnp.int32, x.shape, 0)
    return jnp.sum(x * (r == e).astype(x.dtype), axis=0, keepdims=True)


def _col_select(x, e):
    # column e of x (R, C) as (R, 1) via mask+reduce (no unaligned slices)
    c = lax.broadcasted_iota(jnp.int32, x.shape, 1)
    return jnp.sum(x * (c == e).astype(x.dtype), axis=1, keepdims=True)


# ============================= kernels =======================================

def _make_fused_kernel(hw):
    """model (1x1 conv heads) + BCE/IoU + CE + emb-stats, one streaming pass."""
    def kernel(x_ref, wp_ref, bp_ref, we_ref, be_ref, wc_ref, bc_ref,
               seg_ref, cat_ref, inst_ref,
               pred_ref, scal_ref, cnt_ref, fsum_ref):
        k = pl.program_id(1)

        @pl.when(k == 0)
        def _():
            scal_ref[...] = jnp.zeros_like(scal_ref)
            cnt_ref[...] = jnp.zeros_like(cnt_ref)
            fsum_ref[...] = jnp.zeros_like(fsum_ref)

        tp = x_ref.shape[2]
        valid = _row_mask(k, tp, hw)                  # (1, tp) bool
        vf = valid.astype(F32)

        xv = jnp.where(valid, x_ref[0], 0.0)          # (C_IN, tp), masked

        # --- synthetic "model": 1x1 conv heads (channels on sublanes) -------
        pred = jnp.dot(wp_ref[...], xv, preferred_element_type=F32) + bp_ref[...]   # (1, tp)
        emb = jnp.dot(we_ref[...], xv, preferred_element_type=F32) + be_ref[...]    # (E, tp)
        cat = jnp.dot(wc_ref[...], xv, preferred_element_type=F32) + bc_ref[...]    # (NC, tp)

        pred_ref[...] = pred[None]

        # --- BCEWithLogits(pos_weight=10) + IoU partial sums ----------------
        t = jnp.where(valid, seg_ref[0], 0.0)         # (1, tp)
        sp_neg = jnp.maximum(-pred, 0.0) + jnp.log1p(jnp.exp(-jnp.abs(pred)))  # softplus(-x)
        bce_pix = POS_WEIGHT * t * sp_neg + (1.0 - t) * (pred + sp_neg)
        s = jax.nn.sigmoid(pred)
        bce_sum = jnp.sum(bce_pix * vf, keepdims=True)          # (1, 1)
        inter_sum = jnp.sum(s * t, keepdims=True)
        total_sum = jnp.sum((s + t) * vf, keepdims=True)

        # --- CrossEntropy(ignore_index=255): classes on sublanes ------------
        tgt = jnp.where(valid, cat_ref[0], IGNORE_CE)           # (1, tp) int32
        cls = lax.broadcasted_iota(jnp.int32, (NUM_CLASSES, tp), 0)
        onehot_c = (cls == tgt).astype(F32)                     # (NC, tp)
        m = jnp.max(cat, axis=0, keepdims=True)
        lse = m + jnp.log(jnp.sum(jnp.exp(cat - m), axis=0, keepdims=True))
        correct = jnp.sum(cat * onehot_c, axis=0, keepdims=True)
        valid_ce = (tgt != IGNORE_CE).astype(F32)
        ce_sum = jnp.sum((lse - correct) * valid_ce, keepdims=True)
        ce_cnt = jnp.sum(valid_ce, keepdims=True)

        # --- NDPushPullLoss pass 1: per-instance pixel count + emb sums -----
        g = jnp.where(valid, inst_ref[0], 0)                    # (1, tp) int32
        iid = lax.broadcasted_iota(jnp.int32, (MAX_INST, tp), 0) + 1
        onehot_i = (g == iid).astype(F32)                       # (MAX_INST, tp)
        cnt_ref[...] += jnp.sum(onehot_i, axis=1, keepdims=True)[None]

        ecol = lax.broadcasted_iota(jnp.int32, (MAX_INST, EMB_DIM), 1)
        fsum_tile = jnp.zeros((MAX_INST, EMB_DIM), F32)
        for e in range(EMB_DIM):
            fe = _row_select(emb, e)                                    # (1, tp)
            col = jnp.sum(onehot_i * fe, axis=1, keepdims=True)         # (MI, 1)
            fsum_tile = fsum_tile + col * (ecol == e).astype(F32)
        fsum_ref[...] += fsum_tile[None]

        # --- pack the 5 scalar partial sums into lanes 0..4 -----------------
        lane8 = lax.broadcasted_iota(jnp.int32, (1, 8), 1)
        packed = (bce_sum * (lane8 == 0).astype(F32)
                  + inter_sum * (lane8 == 1).astype(F32)
                  + total_sum * (lane8 == 2).astype(F32)
                  + ce_sum * (lane8 == 3).astype(F32)
                  + ce_cnt * (lane8 == 4).astype(F32))
        scal_ref[...] += packed[None]

    return kernel


def _make_pull_kernel(hw):
    """NDPushPullLoss pass 2: sum of relu(||f - center|| - margin_var)."""
    def kernel(x_ref, we_ref, be_ref, inst_ref, cent_ref, pull_ref):
        k = pl.program_id(1)

        @pl.when(k == 0)
        def _():
            pull_ref[...] = jnp.zeros_like(pull_ref)

        tp = x_ref.shape[2]
        valid = _row_mask(k, tp, hw)

        xv = jnp.where(valid, x_ref[0], 0.0)                        # (C_IN, tp)
        # recompute the 2-channel embedding head (cheaper than a y round-trip)
        f = jnp.dot(we_ref[...], xv, preferred_element_type=F32) + be_ref[...]  # (E, tp)

        g = jnp.where(valid, inst_ref[0], 0)                        # (1, tp)
        iid = lax.broadcasted_iota(jnp.int32, (MAX_INST, tp), 0) + 1
        onehot = (g == iid).astype(F32)                             # (MI, tp)

        c = cent_ref[0]                                             # (MI, E)
        f2 = jnp.sum(f * f, axis=0, keepdims=True)                  # (1, tp)
        c2 = jnp.sum(c * c, axis=1, keepdims=True)                  # (MI, 1)
        cross = jnp.zeros((MAX_INST, tp), F32)
        for e in range(EMB_DIM):
            cross = cross + _col_select(c, e) * _row_select(f, e)   # (MI,1)*(1,tp)
        d2 = f2 + c2 - 2.0 * cross
        dist = jnp.sqrt(jnp.maximum(d2, 0.0))
        contrib = jnp.maximum(dist - MARGIN_VAR, 0.0) * onehot
        pull_ref[...] += jnp.sum(contrib, axis=1, keepdims=True)[None]   # (1, MI, 1)

    return kernel


# ============================= wrappers ======================================

def _fused_pass(x, w_pred, b_pred, w_emb, b_emb, w_cat, b_cat, seg, cat_gt, inst):
    B, c_in, hw = x.shape
    tp = _pick_tile(hw)
    kt = pl.cdiv(hw, tp)
    grid_spec = pltpu.PrefetchScalarGridSpec(
        num_scalar_prefetch=0,
        grid=(B, kt),
        in_specs=[
            pl.BlockSpec((1, c_in, tp), lambda b, k: (b, 0, k)),
            pl.BlockSpec((1, c_in), lambda b, k: (0, 0)),
            pl.BlockSpec((1, 1), lambda b, k: (0, 0)),
            pl.BlockSpec((EMB_DIM, c_in), lambda b, k: (0, 0)),
            pl.BlockSpec((EMB_DIM, 1), lambda b, k: (0, 0)),
            pl.BlockSpec((NUM_CLASSES, c_in), lambda b, k: (0, 0)),
            pl.BlockSpec((NUM_CLASSES, 1), lambda b, k: (0, 0)),
            pl.BlockSpec((1, 1, tp), lambda b, k: (b, 0, k)),
            pl.BlockSpec((1, 1, tp), lambda b, k: (b, 0, k)),
            pl.BlockSpec((1, 1, tp), lambda b, k: (b, 0, k)),
        ],
        out_specs=(
            pl.BlockSpec((1, 1, tp), lambda b, k: (b, 0, k)),
            pl.BlockSpec((1, 1, 8), lambda b, k: (b, 0, 0)),
            pl.BlockSpec((1, MAX_INST, 1), lambda b, k: (b, 0, 0)),
            pl.BlockSpec((1, MAX_INST, EMB_DIM), lambda b, k: (b, 0, 0)),
        ))
    return pl.pallas_call(
        _make_fused_kernel(hw),
        out_shape=(jax.ShapeDtypeStruct((B, 1, hw), F32),
                   jax.ShapeDtypeStruct((B, 1, 8), F32),
                   jax.ShapeDtypeStruct((B, MAX_INST, 1), F32),
                   jax.ShapeDtypeStruct((B, MAX_INST, EMB_DIM), F32)),
        grid_spec=grid_spec,
        compiler_params=pltpu.CompilerParams(
            dimension_semantics=("parallel", "arbitrary")),
    )(x, w_pred, b_pred, w_emb, b_emb, w_cat, b_cat, seg, cat_gt, inst)


def _pull_pass(x, w_emb, b_emb, inst, centers):
    B, c_in, hw = x.shape
    tp = _pick_tile(hw)
    kt = pl.cdiv(hw, tp)
    grid_spec = pltpu.PrefetchScalarGridSpec(
        num_scalar_prefetch=0,
        grid=(B, kt),
        in_specs=[
            pl.BlockSpec((1, c_in, tp), lambda b, k: (b, 0, k)),
            pl.BlockSpec((EMB_DIM, c_in), lambda b, k: (0, 0)),
            pl.BlockSpec((EMB_DIM, 1), lambda b, k: (0, 0)),
            pl.BlockSpec((1, 1, tp), lambda b, k: (b, 0, k)),
            pl.BlockSpec((1, MAX_INST, EMB_DIM), lambda b, k: (b, 0, 0)),
        ],
        out_specs=pl.BlockSpec((1, MAX_INST, 1), lambda b, k: (b, 0, 0)))
    return pl.pallas_call(
        _make_pull_kernel(hw),
        out_shape=jax.ShapeDtypeStruct((B, MAX_INST, 1), F32),
        grid_spec=grid_spec,
        compiler_params=pltpu.CompilerParams(
            dimension_semantics=("parallel", "arbitrary")),
    )(x, w_emb, b_emb, inst, centers)


# =================== Combine_Model_and_Loss forward ==========================

def combine_model_and_loss_forward(params, inputs, image_gt_category=None,
                                   image_gt_segment=None, image_gt_instance=None,
                                   train=True):
    B, c_in, H, W = inputs.shape
    HW = H * W
    P = B * HW

    # free reshapes only: NCHW is already channel-major / pixel-last.
    x = inputs.reshape(B, c_in, HW).astype(F32)

    w = params["w"]                               # (C_OUT_TOTAL, c_in)
    b = params["b"]                               # (C_OUT_TOTAL, 1)
    w_pred, b_pred = w[0:1], b[0:1]
    w_emb, b_emb = w[1:1 + EMB_DIM], b[1:1 + EMB_DIM]
    w_cat, b_cat = w[1 + EMB_DIM:], b[1 + EMB_DIM:]

    if not train:
        zf = jnp.zeros((B, 1, HW), F32)
        zi = jnp.zeros((B, 1, HW), jnp.int32)
        pred, _, _, _ = _fused_pass(x, w_pred, b_pred, w_emb, b_emb, w_cat, b_cat,
                                    zf, zi, zi)
        return pred.reshape(B, 1, H, W)

    seg = image_gt_segment.reshape(B, 1, HW).astype(F32)
    cat_gt = image_gt_category.reshape(B, 1, HW).astype(jnp.int32)
    inst = image_gt_instance.reshape(B, 1, HW).astype(jnp.int32)

    pred, scal, cnt, fsum = _fused_pass(x, w_pred, b_pred, w_emb, b_emb,
                                        w_cat, b_cat, seg, cat_gt, inst)
    pred_2d = pred.reshape(B, 1, H, W)            # NCHW, free reshape

    sums = jnp.sum(scal[:, 0, :], axis=0)         # (8,) cross-batch reduce
    bce_sum, inter_sum, total_sum = sums[0], sums[1], sums[2]
    ce_sum, ce_cnt = sums[3], sums[4]

    # ---- loss_seg_2d = BCEWithLogits(pos_weight=10) + IoULoss(sigmoid(pred), gt)
    # TODO(synk): sigmoid_focal_loss branch (use_focal_loss=True) not implemented.
    bce = bce_sum / P
    iou = (inter_sum + IOU_SMOOTH) / (total_sum - inter_sum + IOU_SMOOTH)
    loss_seg_2d = bce + (1.0 - iou)

    # ---- loss_category_2d = CrossEntropyLoss(ignore_index=255)
    loss_category_2d = ce_sum / jnp.maximum(ce_cnt, 1.0)

    # ---- loss_emb_2d = NDPushPullLoss(1.0, 1.0, 1.0, 5.0, 200)
    # TODO(synk): instance ids > MAX_INST (dynamic C=gt.max() loop in torch) not supported.
    counts = cnt[:, :, 0]                                      # (B, MAX_INST)
    present = (counts > 0).astype(F32)
    centers = fsum / jnp.maximum(counts, 1.0)[..., None]       # (B, MI, E)

    pullsum = _pull_pass(x, w_emb, b_emb, inst, centers)[:, :, 0]   # (B, MI)

    # pull (var) term: mean over present (batch, instance) of per-instance means
    pull_per = pullsum / jnp.maximum(counts, 1.0)
    n_present = jnp.sum(present)
    pull_loss = jnp.where(
        n_present > 0,
        jnp.sum(pull_per * present) / jnp.maximum(n_present, 1.0), 0.0) * VAR_W

    # push (dist) term: tiny pairwise center compute kept in plain JAX (glue)
    diff = centers[:, :, None, :] - centers[:, None, :, :]     # (B, MI, MI, E)
    dists = jnp.sqrt(jnp.sum(diff * diff, axis=-1))
    eye = jnp.eye(MAX_INST, dtype=F32)
    pair_mask = present[:, :, None] * present[:, None, :] * (1.0 - eye)
    push_contrib = jnp.maximum(MARGIN_DIST - dists, 0.0) * pair_mask
    n_pairs = jnp.sum(pair_mask)
    push_loss = jnp.where(
        n_pairs > 0,
        jnp.sum(push_contrib) / jnp.maximum(n_pairs, 1.0), 0.0) * DIST_W

    loss_emb_2d = pull_loss + push_loss

    loss_total_2d = 3.0 * loss_seg_2d + 0.5 * loss_emb_2d + 1.0 * loss_category_2d
    return pred_2d, loss_total_2d, loss_seg_2d, loss_emb_2d, loss_category_2d


# ================================ main =======================================

if __name__ == "__main__":
    B, C_IN, H, W = 2, 4, 16, 16
    key = jax.random.PRNGKey(0)
    k1, k2, k3, k4, k5, k6, k7 = jax.random.split(key, 7)

    inputs = jax.random.normal(k1, (B, C_IN, H, W), F32)
    image_gt_segment = (jax.random.uniform(k2, (B, 1, H, W)) < 0.3).astype(F32)
    image_gt_instance = jax.random.randint(k3, (B, 1, H, W), 0, MAX_INST + 1, jnp.int32)
    image_gt_category = jax.random.randint(k4, (B, H, W), 0, NUM_CLASSES, jnp.int32)
    ignore_mask = jax.random.uniform(k5, (B, H, W)) < 0.1
    image_gt_category = jnp.where(ignore_mask, IGNORE_CE, image_gt_category).astype(jnp.int32)

    params = {
        "w": 0.1 * jax.random.normal(k6, (C_OUT_TOTAL, C_IN), F32),
        "b": 0.01 * jax.random.normal(k7, (C_OUT_TOTAL, 1), F32),
    }

    outs = combine_model_and_loss_forward(
        params, inputs, image_gt_category, image_gt_segment, image_gt_instance,
        train=True)
    jax.block_until_ready(outs)
    print("KERNEL_OK")
</pallas_src>

<mosaic_0001>
module attributes {stable_mosaic.version = 11 : i64} {
  func.func @kernel(%arg0: i32, %arg1: i32, %arg2: memref<1x4x256xf32, #tpu.memory_space<vmem>>, %arg3: memref<1x4xf32, #tpu.memory_space<vmem>>, %arg4: memref<1x1xf32, #tpu.memory_space<vmem>>, %arg5: memref<2x4xf32, #tpu.memory_space<vmem>>, %arg6: memref<2x1xf32, #tpu.memory_space<vmem>>, %arg7: memref<8x4xf32, #tpu.memory_space<vmem>>, %arg8: memref<8x1xf32, #tpu.memory_space<vmem>>, %arg9: memref<1x1x256xf32, #tpu.memory_space<vmem>>, %arg10: memref<1x1x256xi32, #tpu.memory_space<vmem>>, %arg11: memref<1x1x256xi32, #tpu.memory_space<vmem>>, %arg12: memref<1x1x256xf32, #tpu.memory_space<vmem>>, %arg13: memref<1x1x8xf32, #tpu.memory_space<vmem>>, %arg14: memref<1x8x1xf32, #tpu.memory_space<vmem>>, %arg15: memref<1x8x2xf32, #tpu.memory_space<vmem>>) attributes {dimension_semantics = [#tpu.dimension_semantics<parallel>, #tpu.dimension_semantics<arbitrary>], iteration_bounds = array<i64: 2, 1>, scalar_prefetch = 0 : i64, scratch_operands = 0 : i64, tpu.core_type = #tpu.core_type<tc>, window_params = [{transform_indices = @transform_0, window_bounds = array<i64: 1, 4, 256>}, {pipeline_mode = #tpu.pipeline_mode<synchronous>, transform_indices = @transform_1, window_bounds = array<i64: 1, 4>}, {pipeline_mode = #tpu.pipeline_mode<synchronous>, transform_indices = @transform_2, window_bounds = array<i64: 1, 1>}, {pipeline_mode = #tpu.pipeline_mode<synchronous>, transform_indices = @transform_3, window_bounds = array<i64: 2, 4>}, {pipeline_mode = #tpu.pipeline_mode<synchronous>, transform_indices = @transform_4, window_bounds = array<i64: 2, 1>}, {pipeline_mode = #tpu.pipeline_mode<synchronous>, transform_indices = @transform_5, window_bounds = array<i64: 8, 4>}, {pipeline_mode = #tpu.pipeline_mode<synchronous>, transform_indices = @transform_6, window_bounds = array<i64: 8, 1>}, {transform_indices = @transform_7, window_bounds = array<i64: 1, 1, 256>}, {transform_indices = @transform_8, window_bounds = array<i64: 1, 1, 256>}, {transform_indices = @transform_9, window_bounds = array<i64: 1, 1, 256>}, {transform_indices = @transform_10, window_bounds = array<i64: 1, 1, 256>}, {transform_indices = @transform_11, window_bounds = array<i64: 1, 1, 8>}, {transform_indices = @transform_12, window_bounds = array<i64: 1, 8, 1>}, {transform_indices = @transform_13, window_bounds = array<i64: 1, 8, 2>}]} {
    %c0_i32 = arith.constant 0 : i32
    %0 = arith.cmpi eq, %arg1, %c0_i32 : i32
    %1 = arith.extui %0 : i1 to i32
    %c0_i32_0 = arith.constant 0 : i32
    %2 = arith.cmpi ne, %1, %c0_i32_0 : i32
    scf.if %2 {
      %cst_78 = arith.constant 0.000000e+00 : f32
      %217 = vector.broadcast %cst_78 : f32 to vector<1x1x8xf32>
      %c0_79 = arith.constant 0 : index
      %c0_80 = arith.constant 0 : index
      %c0_81 = arith.constant 0 : index
      %218 = vector.load %arg13[%c0_79, %c0_80, %c0_81] : memref<1x1x8xf32, #tpu.memory_space<vmem>>, vector<1x1x8xf32>
      tpu.vector_store %arg13[%c0_79, %c0_80, %c0_81], %217 {strides = array<i32>} : memref<1x1x8xf32, #tpu.memory_space<vmem>>, vector<1x1x8xf32>,
      %cst_82 = arith.constant 0.000000e+00 : f32
      %219 = vector.broadcast %cst_82 : f32 to vector<1x8x1xf32>
      %c0_83 = arith.constant 0 : index
      %c0_84 = arith.constant 0 : index
      %c0_85 = arith.constant 0 : index
      %220 = vector.load %arg14[%c0_83, %c0_84, %c0_85] : memref<1x8x1xf32, #tpu.memory_space<vmem>>, vector<1x8x1xf32>
      tpu.vector_store %arg14[%c0_83, %c0_84, %c0_85], %219 {strides = array<i32>} : memref<1x8x1xf32, #tpu.memory_space<vmem>>, vector<1x8x1xf32>,
      %cst_86 = arith.constant 0.000000e+00 : f32
      %221 = vector.broadcast %cst_86 : f32 to vector<1x8x2xf32>
      %c0_87 = arith.constant 0 : index
      %c0_88 = arith.constant 0 : index
      %c0_89 = arith.constant 0 : index
      %222 = vector.load %arg15[%c0_87, %c0_88, %c0_89] : memref<1x8x2xf32, #tpu.memory_space<vmem>>, vector<1x8x2xf32>
      tpu.vector_store %arg15[%c0_87, %c0_88, %c0_89], %221 {strides = array<i32>} : memref<1x8x2xf32, #tpu.memory_space<vmem>>, vector<1x8x2xf32>,
    } else {
    }
    %3 = tpu.iota {dimensions = array<i32: 1>} : vector<1x256xi32>
    %c256_i32 = arith.constant 256 : i32
    %4 = arith.muli %arg1, %c256_i32 : i32
    %5 = vector.broadcast %4 : i32 to vector<1x256xi32>
    %6 = arith.addi %5, %3 : vector<1x256xi32>
    %c256_i32_1 = arith.constant 256 : i32
    %7 = vector.broadcast %c256_i32_1 : i32 to vector<1x256xi32>
    %8 = arith.cmpi slt, %6, %7 : vector<1x256xi32>
    %9 = arith.extui %8 : vector<1x256xi1> to vector<1x256xi32>
    %10 = arith.sitofp %9 : vector<1x256xi32> to vector<1x256xf32>
    %c0 = arith.constant 0 : index
    %c0_2 = arith.constant 0 : index
    %c0_3 = arith.constant 0 : index
    %11 = vector.load %arg2[%c0, %c0_2, %c0_3] : memref<1x4x256xf32, #tpu.memory_space<vmem>>, vector<1x4x256xf32>
    %12 = vector.shape_cast %11 : vector<1x4x256xf32> to vector<4x256xf32>
    %cst = arith.constant 0.000000e+00 : f32
    %13 = vector.shape_cast %8 : vector<1x256xi1> to vector<1x256xi1>
    %14 = vector.broadcast %13 : vector<1x256xi1> to vector<4x256xi1>
    %15 = vector.broadcast %cst : f32 to vector<4x256xf32>
    %16 = arith.select %14, %12, %15 : vector<4x256xi1>, vector<4x256xf32>
    %c0_4 = arith.constant 0 : index
    %c0_5 = arith.constant 0 : index
    %17 = vector.load %arg3[%c0_4, %c0_5] : memref<1x4xf32, #tpu.memory_space<vmem>>, vector<1x4xf32>
    %cst_6 = arith.constant dense<0.000000e+00> : vector<1x256xf32>
    %18 = tpu.matmul %17, %16, %cst_6 {dimension_numbers = #tpu.dot_dimension_numbers<[1], [0], [0], [1], [0, 0, 1, 1], [], []>} : vector<1x4xf32>, vector<4x256xf32>, vector<1x256xf32> -> vector<1x256xf32>
    %c0_7 = arith.constant 0 : index
    %c0_8 = arith.constant 0 : index
    %19 = vector.load %arg4[%c0_7, %c0_8] : memref<1x1xf32, #tpu.memory_space<vmem>>, vector<1x1xf32>
    %20 = vector.broadcast %19 : vector<1x1xf32> to vector<1x256xf32>
    %21 = arith.addf %18, %20 : vector<1x256xf32>
    %c0_9 = arith.constant 0 : index
    %c0_10 = arith.constant 0 : index
    %22 = vector.load %arg5[%c0_9, %c0_10] : memref<2x4xf32, #tpu.memory_space<vmem>>, vector<2x4xf32>
    %cst_11 = arith.constant dense<0.000000e+00> : vector<2x256xf32>
    %23 = tpu.matmul %22, %16, %cst_11 {dimension_numbers = #tpu.dot_dimension_numbers<[1], [0], [0], [1], [0, 0, 1, 1], [], []>} : vector<2x4xf32>, vector<4x256xf32>, vector<2x256xf32> -> vector<2x256xf32>
    %c0_12 = arith.constant 0 : index
    %c0_13 = arith.constant 0 : index
    %24 = vector.load %arg6[%c0_12, %c0_13] : memref<2x1xf32, #tpu.memory_space<vmem>>, vector<2x1xf32>
    %25 = vector.broadcast %24 : vector<2x1xf32> to vector<2x256xf32>
    %26 = arith.addf %23, %25 : vector<2x256xf32>
    %c0_14 = arith.constant 0 : index
    %c0_15 = arith.constant 0 : index
    %27 = vector.load %arg7[%c0_14, %c0_15] : memref<8x4xf32, #tpu.memory_space<vmem>>, vector<8x4xf32>
    %cst_16 = arith.constant dense<0.000000e+00> : vector<8x256xf32>
    %28 = tpu.matmul %27, %16, %cst_16 {dimension_numbers = #tpu.dot_dimension_numbers<[1], [0], [0], [1], [0, 0, 1, 1], [], []>} : vector<8x4xf32>, vector<4x256xf32>, vector<8x256xf32> -> vector<8x256xf32>
    %c0_17 = arith.constant 0 : index
    %c0_18 = arith.constant 0 : index
    %29 = vector.load %arg8[%c0_17, %c0_18] : memref<8x1xf32, #tpu.memory_space<vmem>>, vector<8x1xf32>
    %30 = vector.broadcast %29 : vector<8x1xf32> to vector<8x256xf32>
    %31 = arith.addf %28, %30 : vector<8x256xf32>
    %32 = vector.shape_cast %21 : vector<1x256xf32> to vector<1x1x256xf32>
    %c0_19 = arith.constant 0 : index
    %c0_20 = arith.constant 0 : index
    %c0_21 = arith.constant 0 : index
    %33 = vector.load %arg12[%c0_19, %c0_20, %c0_21] : memref<1x1x256xf32, #tpu.memory_space<vmem>>, vector<1x1x256xf32>
    tpu.vector_store %arg12[%c0_19, %c0_20, %c0_21], %32 {strides = array<i32>} : memref<1x1x256xf32, #tpu.memory_space<vmem>>, vector<1x1x256xf32>,
    %c0_22 = arith.constant 0 : index
    %c0_23 = arith.constant 0 : index
    %c0_24 = arith.constant 0 : index
    %34 = vector.load %arg9[%c0_22, %c0_23, %c0_24] : memref<1x1x256xf32, #tpu.memory_space<vmem>>, vector<1x1x256xf32>
    %35 = vector.shape_cast %34 : vector<1x1x256xf32> to vector<1x256xf32>
    %cst_25 = arith.constant 0.000000e+00 : f32
    %36 = vector.broadcast %cst_25 : f32 to vector<1x256xf32>
    %37 = arith.select %8, %35, %36 : vector<1x256xi1>, vector<1x256xf32>
    %cst_26 = arith.constant 0.000000e+00 : f32
    %38 = vector.broadcast %cst_26 : f32 to vector<1x256xf32>
    %39 = arith.subf %38, %21 : vector<1x256xf32>
    %cst_27 = arith.constant 0.000000e+00 : f32
    %40 = vector.broadcast %cst_27 : f32 to vector<1x256xf32>
    %41 = arith.maximumf %39, %40 : vector<1x256xf32>
    %42 = math.absf %21 : vector<1x256xf32>
    %cst_28 = arith.constant 0.000000e+00 : f32
    %43 = vector.broadcast %cst_28 : f32 to vector<1x256xf32>
    %44 = arith.subf %43, %42 : vector<1x256xf32>
    %45 = math.exp %44 : vector<1x256xf32>
    %46 = math.log1p %45 : vector<1x256xf32>
    %47 = arith.addf %41, %46 : vector<1x256xf32>
    %cst_29 = arith.constant 1.000000e+01 : f32
    %48 = vector.broadcast %cst_29 : f32 to vector<1x256xf32>
    %49 = arith.mulf %48, %37 : vector<1x256xf32>
    %50 = arith.mulf %49, %47 : vector<1x256xf32>
    %cst_30 = arith.constant 1.000000e+00 : f32
    %51 = vector.broadcast %cst_30 : f32 to vector<1x256xf32>
    %52 = arith.subf %51, %37 : vector<1x256xf32>
    %53 = arith.addf %21, %47 : vector<1x256xf32>
    %54 = arith.mulf %52, %53 : vector<1x256xf32>
    %55 = arith.addf %50, %54 : vector<1x256xf32>
    %56 = arith.negf %21 : vector<1x256xf32>
    %57 = math.exp %56 : vector<1x256xf32>
    %cst_31 = arith.constant 1.000000e+00 : f32
    %58 = vector.broadcast %cst_31 : f32 to vector<1x256xf32>
    %59 = arith.addf %58, %57 : vector<1x256xf32>
    %60 = arith.divf %58, %59 : vector<1x256xf32>
    %61 = arith.mulf %55, %10 : vector<1x256xf32>
    %62 = vector.shape_cast %61 : vector<1x256xf32> to vector<1x1x256xf32>
    %cst_32 = arith.constant dense<0.000000e+00> : vector<1xf32>
    %63 = vector.multi_reduction <add>, %62, %cst_32 [1, 2] : vector<1x1x256xf32> to vector<1xf32>
    %64 = vector.shape_cast %63 : vector<1xf32> to vector<1x1x1xf32>
    %65 = vector.extract %64[0, 0, 0] : f32 from vector<1x1x1xf32>
    %66 = vector.broadcast %65 : f32 to vector<1x1xf32>
    %67 = arith.mulf %60, %37 : vector<1x256xf32>
    %68 = vector.shape_cast %67 : vector<1x256xf32> to vector<1x1x256xf32>
    %cst_33 = arith.constant dense<0.000000e+00> : vector<1xf32>
    %69 = vector.multi_reduction <add>, %68, %cst_33 [1, 2] : vector<1x1x256xf32> to vector<1xf32>
    %70 = vector.shape_cast %69 : vector<1xf32> to vector<1x1x1xf32>
    %71 = vector.extract %70[0, 0, 0] : f32 from vector<1x1x1xf32>
    %72 = vector.broadcast %71 : f32 to vector<1x1xf32>
    %73 = arith.addf %60, %37 : vector<1x256xf32>
    %74 = arith.mulf %73, %10 : vector<1x256xf32>
    %75 = vector.shape_cast %74 : vector<1x256xf32> to vector<1x1x256xf32>
    %cst_34 = arith.constant dense<0.000000e+00> : vector<1xf32>
    %76 = vector.multi_reduction <add>, %75, %cst_34 [1, 2] : vector<1x1x256xf32> to vector<1xf32>
    %77 = vector.shape_cast %76 : vector<1xf32> to vector<1x1x1xf32>
    %78 = vector.extract %77[0, 0, 0] : f32 from vector<1x1x1xf32>
    %79 = vector.broadcast %78 : f32 to vector<1x1xf32>
    %c0_35 = arith.constant 0 : index
    %c0_36 = arith.constant 0 : index
    %c0_37 = arith.constant 0 : index
    %80 = vector.load %arg10[%c0_35, %c0_36, %c0_37] : memref<1x1x256xi32, #tpu.memory_space<vmem>>, vector<1x1x256xi32>
    %81 = vector.shape_cast %80 : vector<1x1x256xi32> to vector<1x256xi32>
    %c255_i32 = arith.constant 255 : i32
    %82 = vector.broadcast %c255_i32 : i32 to vector<1x256xi32>
    %83 = arith.select %8, %81, %82 : vector<1x256xi1>, vector<1x256xi32>
    %84 = tpu.iota {dimensions = array<i32: 0>} : vector<8x256xi32>
    %85 = vector.broadcast %83 : vector<1x256xi32> to vector<8x256xi32>
    %86 = arith.cmpi eq, %84, %85 : vector<8x256xi32>
    %87 = arith.extui %86 : vector<8x256xi1> to vector<8x256xi32>
    %88 = arith.sitofp %87 : vector<8x256xi32> to vector<8x256xf32>
    %cst_38 = arith.constant dense<0xFF800000> : vector<256xf32>
    %89 = vector.multi_reduction <maximumf>, %31, %cst_38 [0] : vector<8x256xf32> to vector<256xf32>
    %90 = vector.shape_cast %89 : vector<256xf32> to vector<1x256xf32>
    %91 = vector.broadcast %90 : vector<1x256xf32> to vector<8x256xf32>
    %92 = arith.subf %31, %91 : vector<8x256xf32>
    %93 = math.exp %92 : vector<8x256xf32>
    %cst_39 = arith.constant dense<0.000000e+00> : vector<256xf32>
    %94 = vector.multi_reduction <add>, %93, %cst_39 [0] : vector<8x256xf32> to vector<256xf32>
    %95 = vector.shape_cast %94 : vector<256xf32> to vector<1x256xf32>
    %96 = math.log %95 : vector<1x256xf32>
    %97 = arith.addf %90, %96 : vector<1x256xf32>
    %98 = arith.mulf %31, %88 : vector<8x256xf32>
    %cst_40 = arith.constant dense<0.000000e+00> : vector<256xf32>
    %99 = vector.multi_reduction <add>, %98, %cst_40 [0] : vector<8x256xf32> to vector<256xf32>
    %100 = vector.shape_cast %99 : vector<256xf32> to vector<1x256xf32>
    %c255_i32_41 = arith.constant 255 : i32
    %101 = vector.broadcast %c255_i32_41 : i32 to vector<1x256xi32>
    %102 = arith.cmpi ne, %83, %101 : vector<1x256xi32>
    %103 = arith.extui %102 : vector<1x256xi1> to vector<1x256xi32>
    %104 = arith.sitofp %103 : vector<1x256xi32> to vector<1x256xf32>
    %105 = arith.subf %97, %100 : vector<1x256xf32>
    %106 = arith.mulf %105, %104 : vector<1x256xf32>
    %107 = vector.shape_cast %106 : vector<1x256xf32> to vector<1x1x256xf32>
    %cst_42 = arith.constant dense<0.000000e+00> : vector<1xf32>
    %108 = vector.multi_reduction <add>, %107, %cst_42 [1, 2] : vector<1x1x256xf32> to vector<1xf32>
    %109 = vector.shape_cast %108 : vector<1xf32> to vector<1x1x1xf32>
    %110 = vector.extract %109[0, 0, 0] : f32 from vector<1x1x1xf32>
    %111 = vector.broadcast %110 : f32 to vector<1x1xf32>
    %112 = vector.shape_cast %104 : vector<1x256xf32> to vector<1x1x256xf32>
    %cst_43 = arith.constant dense<0.000000e+00> : vector<1xf32>
    %113 = vector.multi_reduction <add>, %112, %cst_43 [1, 2] : vector<1x1x256xf32> to vector<1xf32>
    %114 = vector.shape_cast %113 : vector<1xf32> to vector<1x1x1xf32>
    %115 = vector.extract %114[0, 0, 0] : f32 from vector<1x1x1xf32>
    %116 = vector.broadcast %115 : f32 to vector<1x1xf32>
    %c0_44 = arith.constant 0 : index
    %c0_45 = arith.constant 0 : index
    %c0_46 = arith.constant 0 : index
    %117 = vector.load %arg11[%c0_44, %c0_45, %c0_46] : memref<1x1x256xi32, #tpu.memory_space<vmem>>, vector<1x1x256xi32>
    %118 = vector.shape_cast %117 : vector<1x1x256xi32> to vector<1x256xi32>
    %c0_i32_47 = arith.constant 0 : i32
    %119 = vector.broadcast %c0_i32_47 : i32 to vector<1x256xi32>
    %120 = arith.select %8, %118, %119 : vector<1x256xi1>, vector<1x256xi32>
    %121 = tpu.iota {dimensions = array<i32: 0>} : vector<8x256xi32>
    %c1_i32 = arith.constant 1 : i32
    %122 = vector.broadcast %c1_i32 : i32 to vector<8x256xi32>
    %123 = arith.addi %121, %122 : vector<8x256xi32>
    %124 = vector.broadcast %120 : vector<1x256xi32> to vector<8x256xi32>
    %125 = arith.cmpi eq, %124, %123 : vector<8x256xi32>
    %126 = arith.extui %125 : vector<8x256xi1> to vector<8x256xi32>
    %127 = arith.sitofp %126 : vector<8x256xi32> to vector<8x256xf32>
    %c0_48 = arith.constant 0 : index
    %c0_49 = arith.constant 0 : index
    %c0_50 = arith.constant 0 : index
    %128 = vector.load %arg14[%c0_48, %c0_49, %c0_50] : memref<1x8x1xf32, #tpu.memory_space<vmem>>, vector<1x8x1xf32>
    %cst_51 = arith.constant dense<0.000000e+00> : vector<8xf32>
    %129 = vector.multi_reduction <add>, %127, %cst_51 [1] : vector<8x256xf32> to vector<8xf32>
    %130 = vector.shape_cast %129 : vector<8xf32> to vector<8x1xf32>
    %131 = vector.shape_cast %130 : vector<8x1xf32> to vector<1x8x1xf32>
    %132 = arith.addf %128, %131 : vector<1x8x1xf32>
    %c0_52 = arith.constant 0 : index
    %c0_53 = arith.constant 0 : index
    %c0_54 = arith.constant 0 : index
    %133 = vector.load %arg14[%c0_52, %c0_53, %c0_54] : memref<1x8x1xf32, #tpu.memory_space<vmem>>, vector<1x8x1xf32>
    tpu.vector_store %arg14[%c0_52, %c0_53, %c0_54], %132 {strides = array<i32>} : memref<1x8x1xf32, #tpu.memory_space<vmem>>, vector<1x8x1xf32>,
    %134 = tpu.iota {dimensions = array<i32: 1>} : vector<8x2xi32>
    %cst_55 = arith.constant 0.000000e+00 : f32
    %135 = vector.broadcast %cst_55 : f32 to vector<8x2xf32>
    %136 = tpu.iota {dimensions = array<i32: 0>} : vector<2x256xi32>
    %c0_i32_56 = arith.constant 0 : i32
    %137 = vector.broadcast %c0_i32_56 : i32 to vector<2x256xi32>
    %138 = arith.cmpi eq, %136, %137 : vector<2x256xi32>
    %139 = arith.extui %138 : vector<2x256xi1> to vector<2x256xi32>
    %140 = arith.sitofp %139 : vector<2x256xi32> to vector<2x256xf32>
    %141 = arith.mulf %26, %140 : vector<2x256xf32>
    %cst_57 = arith.constant dense<0.000000e+00> : vector<256xf32>
    %142 = vector.multi_reduction <add>, %141, %cst_57 [0] : vector<2x256xf32> to vector<256xf32>
    %143 = vector.shape_cast %142 : vector<256xf32> to vector<1x256xf32>
    %144 = vector.broadcast %143 : vector<1x256xf32> to vector<8x256xf32>
    %145 = arith.mulf %127, %144 : vector<8x256xf32>
    %cst_58 = arith.constant dense<0.000000e+00> : vector<8xf32>
    %146 = vector.multi_reduction <add>, %145, %cst_58 [1] : vector<8x256xf32> to vector<8xf32>
    %147 = vector.shape_cast %146 : vector<8xf32> to vector<8x1xf32>
    %c0_i32_59 = arith.constant 0 : i32
    %148 = vector.broadcast %c0_i32_59 : i32 to vector<8x2xi32>
    %149 = arith.cmpi eq, %134, %148 : vector<8x2xi32>
    %150 = arith.extui %149 : vector<8x2xi1> to vector<8x2xi32>
    %151 = arith.sitofp %150 : vector<8x2xi32> to vector<8x2xf32>
    %152 = vector.broadcast %147 : vector<8x1xf32> to vector<8x2xf32>
    %153 = arith.mulf %152, %151 : vector<8x2xf32>
    %154 = arith.addf %135, %153 : vector<8x2xf32>
    %155 = tpu.iota {dimensions = array<i32: 0>} : vector<2x256xi32>
    %c1_i32_60 = arith.constant 1 : i32
    %156 = vector.broadcast %c1_i32_60 : i32 to vector<2x256xi32>
    %157 = arith.cmpi eq, %155, %156 : vector<2x256xi32>
    %158 = arith.extui %157 : vector<2x256xi1> to vector<2x256xi32>
    %159 = arith.sitofp %158 : vector<2x256xi32> to vector<2x256xf32>
    %160 = arith.mulf %26, %159 : vector<2x256xf32>
    %cst_61 = arith.constant dense<0.000000e+00> : vector<256xf32>
    %161 = vector.multi_reduction <add>, %160, %cst_61 [0] : vector<2x256xf32> to vector<256xf32>
    %162 = vector.shape_cast %161 : vector<256xf32> to vector<1x256xf32>
    %163 = vector.broadcast %162 : vector<1x256xf32> to vector<8x256xf32>
    %164 = arith.mulf %127, %163 : vector<8x256xf32>
    %cst_62 = arith.constant dense<0.000000e+00> : vector<8xf32>
    %165 = vector.multi_reduction <add>, %164, %cst_62 [1] : vector<8x256xf32> to vector<8xf32>
    %166 = vector.shape_cast %165 : vector<8xf32> to vector<8x1xf32>
    %c1_i32_63 = arith.constant 1 : i32
    %167 = vector.broadcast %c1_i32_63 : i32 to vector<8x2xi32>
    %168 = arith.cmpi eq, %134, %167 : vector<8x2xi32>
    %169 = arith.extui %168 : vector<8x2xi1> to vector<8x2xi32>
    %170 = arith.sitofp %169 : vector<8x2xi32> to vector<8x2xf32>
    %171 = vector.broadcast %166 : vector<8x1xf32> to vector<8x2xf32>
    %172 = arith.mulf %171, %170 : vector<8x2xf32>
    %173 = arith.addf %154, %172 : vector<8x2xf32>
    %c0_64 = arith.constant 0 : index
    %c0_65 = arith.constant 0 : index
    %c0_66 = arith.constant 0 : index
    %174 = vector.load %arg15[%c0_64, %c0_65, %c0_66] : memref<1x8x2xf32, #tpu.memory_space<vmem>>, vector<1x8x2xf32>
    %175 = vector.shape_cast %173 : vector<8x2xf32> to vector<1x8x2xf32>
    %176 = arith.addf %174, %175 : vector<1x8x2xf32>
    %c0_67 = arith.constant 0 : index
    %c0_68 = arith.constant 0 : index
    %c0_69 = arith.constant 0 : index
    %177 = vector.load %arg15[%c0_67, %c0_68, %c0_69] : memref<1x8x2xf32, #tpu.memory_space<vmem>>, vector<1x8x2xf32>
    tpu.vector_store %arg15[%c0_67, %c0_68, %c0_69], %176 {strides = array<i32>} : memref<1x8x2xf32, #tpu.memory_space<vmem>>, vector<1x8x2xf32>,
    %178 = tpu.iota {dimensions = array<i32: 1>} : vector<1x8xi32>
    %c0_i32_70 = arith.constant 0 : i32
    %179 = vector.broadcast %c0_i32_70 : i32 to vector<1x8xi32>
    %180 = arith.cmpi eq, %178, %179 : vector<1x8xi32>
    %181 = arith.extui %180 : vector<1x8xi1> to vector<1x8xi32>
    %182 = arith.sitofp %181 : vector<1x8xi32> to vector<1x8xf32>
    %183 = vector.broadcast %66 : vector<1x1xf32> to vector<1x8xf32>
    %184 = arith.mulf %183, %182 : vector<1x8xf32>
    %c1_i32_71 = arith.constant 1 : i32
    %185 = vector.broadcast %c1_i32_71 : i32 to vector<1x8xi32>
    %186 = arith.cmpi eq, %178, %185 : vector<1x8xi32>
    %187 = arith.extui %186 : vector<1x8xi1> to vector<1x8xi32>
    %188 = arith.sitofp %187 : vector<1x8xi32> to vector<1x8xf32>
    %189 = vector.broadcast %72 : vector<1x1xf32> to vector<1x8xf32>
    %190 = arith.mulf %189, %188 : vector<1x8xf32>
    %191 = arith.addf %184, %190 : vector<1x8xf32>
    %c2_i32 = arith.constant 2 : i32
    %192 = vector.broadcast %c2_i32 : i32 to vector<1x8xi32>
    %193 = arith.cmpi eq, %178, %192 : vector<1x8xi32>
    %194 = arith.extui %193 : vector<1x8xi1> to vector<1x8xi32>
    %195 = arith.sitofp %194 : vector<1x8xi32> to vector<1x8xf32>
    %196 = vector.broadcast %79 : vector<1x1xf32> to vector<1x8xf32>
    %197 = arith.mulf %196, %195 : vector<1x8xf32>
    %198 = arith.addf %191, %197 : vector<1x8xf32>
    %c3_i32 = arith.constant 3 : i32
    %199 = vector.broadcast %c3_i32 : i32 to vector<1x8xi32>
    %200 = arith.cmpi eq, %178, %199 : vector<1x8xi32>
    %201 = arith.extui %200 : vector<1x8xi1> to vector<1x8xi32>
    %202 = arith.sitofp %201 : vector<1x8xi32> to vector<1x8xf32>
    %203 = vector.broadcast %111 : vector<1x1xf32> to vector<1x8xf32>
    %204 = arith.mulf %203, %202 : vector<1x8xf32>
    %205 = arith.addf %198, %204 : vector<1x8xf32>
    %c4_i32 = arith.constant 4 : i32
    %206 = vector.broadcast %c4_i32 : i32 to vector<1x8xi32>
    %207 = arith.cmpi eq, %178, %206 : vector<1x8xi32>
    %208 = arith.extui %207 : vector<1x8xi1> to vector<1x8xi32>
    %209 = arith.sitofp %208 : vector<1x8xi32> to vector<1x8xf32>
    %210 = vector.broadcast %116 : vector<1x1xf32> to vector<1x8xf32>
    %211 = arith.mulf %210, %209 : vector<1x8xf32>
    %212 = arith.addf %205, %211 : vector<1x8xf32>
    %c0_72 = arith.constant 0 : index
    %c0_73 = arith.constant 0 : index
    %c0_74 = arith.constant 0 : index
    %213 = vector.load %arg13[%c0_72, %c0_73, %c0_74] : memref<1x1x8xf32, #tpu.memory_space<vmem>>, vector<1x1x8xf32>
    %214 = vector.shape_cast %212 : vector<1x8xf32> to vector<1x1x8xf32>
    %215 = arith.addf %213, %214 : vector<1x1x8xf32>
    %c0_75 = arith.constant 0 : index
    %c0_76 = arith.constant 0 : index
    %c0_77 = arith.constant 0 : index
    %216 = vector.load %arg13[%c0_75, %c0_76, %c0_77] : memref<1x1x8xf32, #tpu.memory_space<vmem>>, vector<1x1x8xf32>
    tpu.vector_store %arg13[%c0_75, %c0_76, %c0_77], %215 {strides = array<i32>} : memref<1x1x8xf32, #tpu.memory_space<vmem>>, vector<1x1x8xf32>,
    return
  }
  func.func @transform_0(%arg0: i32, %arg1: i32) -> (i32, i32, i32) {
    %c0_i32 = arith.constant 0 : i32
    %c0_i32_0 = arith.constant 0 : i32
    return %arg0, %c0_i32, %arg1 : i32, i32, i32
  }
  func.func @transform_1(%arg0: i32, %arg1: i32) -> (i32, i32) {
    %c0_i32 = arith.constant 0 : i32
    %c0_i32_0 = arith.constant 0 : i32
    %c0_i32_1 = arith.constant 0 : i32
    return %c0_i32, %c0_i32_0 : i32, i32
  }
  func.func @transform_2(%arg0: i32, %arg1: i32) -> (i32, i32) {
    %c0_i32 = arith.constant 0 : i32
    %c0_i32_0 = arith.constant 0 : i32
    %c0_i32_1 = arith.constant 0 : i32
    return %c0_i32, %c0_i32_0 : i32, i32
  }
  func.func @transform_3(%arg0: i32, %arg1: i32) -> (i32, i32) {
    %c0_i32 = arith.constant 0 : i32
    %c0_i32_0 = arith.constant 0 : i32
    %c0_i32_1 = arith.constant 0 : i32
    return %c0_i32, %c0_i32_0 : i32, i32
  }
  func.func @transform_4(%arg0: i32, %arg1: i32) -> (i32, i32) {
    %c0_i32 = arith.constant 0 : i32
    %c0_i32_0 = arith.constant 0 : i32
    %c0_i32_1 = arith.constant 0 : i32
    return %c0_i32, %c0_i32_0 : i32, i32
  }
  func.func @transform_5(%arg0: i32, %arg1: i32) -> (i32, i32) {
    %c0_i32 = arith.constant 0 : i32
    %c0_i32_0 = arith.constant 0 : i32
    %c0_i32_1 = arith.constant 0 : i32
    return %c0_i32, %c0_i32_0 : i32, i32
  }
  func.func @transform_6(%arg0: i32, %arg1: i32) -> (i32, i32) {
    %c0_i32 = arith.constant 0 : i32
    %c0_i32_0 = arith.constant 0 : i32
    %c0_i32_1 = arith.constant 0 : i32
    return %c0_i32, %c0_i32_0 : i32, i32
  }
  func.func @transform_7(%arg0: i32, %arg1: i32) -> (i32, i32, i32) {
    %c0_i32 = arith.constant 0 : i32
    %c0_i32_0 = arith.constant 0 : i32
    return %arg0, %c0_i32, %arg1 : i32, i32, i32
  }
  func.func @transform_8(%arg0: i32, %arg1: i32) -> (i32, i32, i32) {
    %c0_i32 = arith.constant 0 : i32
    %c0_i32_0 = arith.constant 0 : i32
    return %arg0, %c0_i32, %arg1 : i32, i32, i32
  }
  func.func @transform_9(%arg0: i32, %arg1: i32) -> (i32, i32, i32) {
    %c0_i32 = arith.constant 0 : i32
    %c0_i32_0 = arith.constant 0 : i32
    return %arg0, %c0_i32, %arg1 : i32, i32, i32
  }
  func.func @transform_10(%arg0: i32, %arg1: i32) -> (i32, i32, i32) {
    %c0_i32 = arith.constant 0 : i32
    %c0_i32_0 = arith.constant 0 : i32
    return %arg0, %c0_i32, %arg1 : i32, i32, i32
  }
  func.func @transform_11(%arg0: i32, %arg1: i32) -> (i32, i32, i32) {
    %c0_i32 = arith.constant 0 : i32
    %c0_i32_0 = arith.constant 0 : i32
    %c0_i32_1 = arith.constant 0 : i32
    return %arg0, %c0_i32, %c0_i32_0 : i32, i32, i32
  }
  func.func @transform_12(%arg0: i32, %arg1: i32) -> (i32, i32, i32) {
    %c0_i32 = arith.constant 0 : i32
    %c0_i32_0 = arith.constant 0 : i32
    %c0_i32_1 = arith.constant 0 : i32
    return %arg0, %c0_i32, %c0_i32_0 : i32, i32, i32
  }
  func.func @transform_13(%arg0: i32, %arg1: i32) -> (i32, i32, i32) {
    %c0_i32 = arith.constant 0 : i32
    %c0_i32_0 = arith.constant 0 : i32
    %c0_i32_1 = arith.constant 0 : i32
    return %arg0, %c0_i32, %c0_i32_0 : i32, i32, i32
  }
}

</mosaic_0001>

<llo_original>
// kernel: tpu_custom_call.1
$region0: #{tpu_custom_call.1}
  #allocation0 [shape = 'u32[]', space=smem, size = 0x4, offset = 0x4, fixed_abs, tag = 'smem constant byte address 0x4 - core index']
  #allocation1 [shape = 'u32[72,128]{1,0:T(1,128)}', space=vmem, size = 0x9000, scoped, tag = 'internal scratch']
  #allocation2 [shape = 'f32[1,1]{1,0:T(1,128)S(1)}', space=vmem, size = 0x200, scoped, tag = 'scoped memory for tpu_custom_call.1']
  %s0 = inlined_call_operand.vmem [shape: f32[2,4,256], index: 0, kind: input, shape index: {}]
  %s1 = inlined_call_operand.hbm [shape: f32[1,4], index: 1, kind: input, shape index: {}]
  %s2 = inlined_call_operand.<no memory space> [shape: f32[1,1], index: 2, kind: input, shape index: {}]
  %s3 = inlined_call_operand.hbm [shape: f32[2,4], index: 3, kind: input, shape index: {}]
  %s4 = inlined_call_operand.vmem [shape: f32[2,1], index: 4, kind: input, shape index: {}]
  %s5 = inlined_call_operand.vmem [shape: f32[8,4], index: 5, kind: input, shape index: {}]
  %s6 = inlined_call_operand.vmem [shape: f32[8,1], index: 6, kind: input, shape index: {}]
  %s7 = inlined_call_operand.vmem [shape: f32[2,1,256], index: 7, kind: input, shape index: {}]
  %s8 = inlined_call_operand.vmem [shape: s32[2,1,256], index: 8, kind: input, shape index: {}]
  %s9 = inlined_call_operand.vmem [shape: s32[2,1,256], index: 9, kind: input, shape index: {}]
  %s10 = inlined_call_operand.hbm [shape: f32[2,1,256], index: 10, kind: output, shape index: {0}]
  %s11 = inlined_call_operand.hbm [shape: f32[2,1,8], index: 11, kind: output, shape index: {1}]
  %s12 = inlined_call_operand.vmem [shape: f32[2,8,1], index: 12, kind: output, shape index: {2}]
  %s13 = inlined_call_operand.vmem [shape: f32[2,8,2], index: 13, kind: output, shape index: {3}]
  %14 = xla_tuple %s10, %s11, %s12, %s13
  %s15 = sld [smem:[#allocation0]]
  $region109: #{tpu_custom_call.1} parent=0
    _
  %s17 = ssub.s32 1, %s15
  %s18 = scalar_select 0, %s17, %s15
  %v19 = vstv %s2
  %20 = vst [vmem:[#allocation2] sm:$0x1] %v19
  $region1: #{tpu_custom_call.1} parent=0
    #allocation3 [shape = 'u8[512]{0}', space=vmem, size = 0x400, scoped, tag = 'input window, operand 1, single buffered']
    #allocation4 [shape = 's32[2]{0}', space=sflag, size = 0x8, scoped, tag = 'scoped memory for tpu_custom_call.1']
    #allocation5 [shape = 's32[2]{0}', space=sflag, size = 0x8, scoped, tag = 'scoped memory for tpu_custom_call.1']
    #allocation6 [shape = 'u8[1024]{0}', space=vmem, size = 0x400, scoped, tag = 'input window, operand 3, single buffered']
    #allocation7 [shape = 's32[1]{0}', space=sflag, size = 0x4, scoped, tag = 'scoped memory for tpu_custom_call.1']
    #allocation8 [shape = 'u8[2048]{0}', space=vmem, size = 0x800, scoped, tag = 'output window, operand 0']
    #allocation9 [shape = 'u8[1024]{0}', space=vmem, size = 0x400, scoped, tag = 'output window, operand 1']
    #allocation10 [shape = 's32[2]{0}', space=sflag, size = 0x8, scoped, tag = 'scoped memory for tpu_custom_call.1']
    %21 = vsyncpa [#allocation4], 0
    %22 = vsyncpa [#allocation7], 0
    %23 = vsyncpa [#allocation5], 0
    %s24 = scalar_lea.sflag [#allocation5], 1
    %25 = vsyncpa %s24, 0
    %26 = vsyncpa [#allocation10], 0
    %s27 = scalar_lea.sflag [#allocation10], 1
    %28 = vsyncpa %s27, 0
    loop: start=0, step=1, limit=4
    $region2: #{tpu_custom_call.1} parent=1 // loop_pre_header
      _
    $region3: #{tpu_custom_call.1} parent=1 // loop_header
      %s30 = sphi 0, %s34
      %p31 = scmp.ge.s32.totalorder %s30, 4
      %s37 = sphi 0, %s49
      %s38 = sphi 0, %s45
      %s39 = sphi 0, %s37
      %s40 = sphi 0, %s38
      %s41 = sphi 0, %s39
      %s42 = sphi 0, %s40
      %s54 = sphi 0, %s56
      %s57 = sphi 0, %s54
      %s58 = sphi 0, %s57
      %s74 = sphi 0, %s58
      %s78 = sphi 0, %s78
      %s80 = sphi 0, %s78
      %s81 = sphi 0, %s80
      %s95 = sphi 0, %s81
      %s99 = sphi 0, %s99
      %s101 = sphi 0, %s99
      %s102 = sphi 0, %s101
      %s116 = sphi 0, %s102
      %s120 = sphi 0, %s120
      %s122 = sphi 0, %s120
      %s123 = sphi 0, %s122
      %s137 = sphi 0, %s123
      %s141 = sphi 0, %s141
      %s143 = sphi 0, %s141
      %s144 = sphi 0, %s143
      %s158 = sphi 0, %s144
      %s162 = sphi 0, %s162
      %s164 = sphi 0, %s162
      %s165 = sphi 0, %s164
      %s179 = sphi 0, %s165
      %s183 = sphi 0, %s183
      %s185 = sphi 0, %s183
      %s186 = sphi 0, %s185
      %s200 = sphi 0, %s186
      %s208 = sphi 0, %s210
      %s211 = sphi 0, %s208
      %s212 = sphi 0, %s211
      %s228 = sphi 0, %s212
      %s236 = sphi 0, %s238
      %s239 = sphi 0, %s236
      %s240 = sphi 0, %s239
      %s256 = sphi 0, %s240
      %s264 = sphi 0, %s266
      %s267 = sphi 0, %s264
      %s268 = sphi 0, %s267
      %s284 = sphi 0, %s268
      %s292 = sphi 0, %s294
      %s295 = sphi 0, %s292
      %s296 = sphi 0, %s295
      %s312 = sphi 0, %s296
      %s318 = sphi 0, %s320
      %s321 = sphi 0, %s318
      %s322 = sphi 0, %s321
      %s338 = sphi 0, %s322
      %s344 = sphi 0, %s346
      %s347 = sphi 0, %s344
      %s348 = sphi 0, %s347
      %s364 = sphi 0, %s348
      %s370 = sphi 0, %s372
      %s373 = sphi 0, %s370
      %s374 = sphi 0, %s373
      %s390 = sphi 0, %s374
    $region4: #{tpu_custom_call.1} parent=1 // loop_header_branch
      %33 = sbr.rel (%p31) target = $region8
    $region5: #{tpu_custom_call.1} parent=1 // loop_body
      %s35 = ssub.s32 %s30, 1
      %s36 = ssub.s32 %s30, 2
      %s43 = sadd.s32 1, %s38
      %p44 = scmp.ge.s32.totalorder %s43, 1
      %s45 = scalar_select %p44, 0, %s43
      %s46 = sadd.s32 1, %s37
      %s47 = scalar_select %p44, %s46, %s37
      %p48 = scmp.ge.s32.totalorder %s47, 2
      %s49 = scalar_select %p48, 0, %s47
      %s50 = ssub.s32 %s37, %s49
      %s51 = ssub.s32 %s38, %s45
      %s52 = sor.u32 %s50, %s51
      %p53 = scmp.eq.s32.totalorder %s52, 0
      %s55 = sadd.s32 %s54, 1
      %s56 = scalar_select %p53, %s54, %s55
      %p59 = pneg %p53
      %p60 = scmp.eq.s32.totalorder %s30, 1
      %p61 = por %p59, %p60
      %p62 = scmp.ne.s32.totalorder %s54, %s57
      %p63 = scmp.eq.s32.totalorder %s30, 0
      %p64 = por %p62, %p63
      %p65 = scmp.ne.s32.totalorder %s54, %s57
      %p66 = scmp.eq.s32.totalorder %s35, 1
      %p67 = por %p65, %p66
      %p68 = scmp.ne.s32.totalorder %s57, %s58
      %p69 = scmp.eq.s32.totalorder %s35, 0
      %p70 = por %p68, %p69
      %p71 = scmp.ne.s32.totalorder %s57, %s58
      %p72 = scmp.eq.s32.totalorder %s36, 1
      %p73 = por %p71, %p72
      %p75 = scmp.ne.s32.totalorder %s58, %s74
      %p76 = scmp.eq.s32.totalorder %s36, 0
      %p77 = por %p75, %p76
      %s79 = sadd.s32 %s78, 1
      %p82 = scmp.eq.s32.totalorder %s30, 1
      %p83 = scmp.ne.s32.totalorder %s78, %s80
      %p84 = scmp.eq.s32.totalorder %s30, 0
      %p85 = por %p83, %p84
      %p86 = scmp.ne.s32.totalorder %s78, %s80
      %p87 = scmp.eq.s32.totalorder %s35, 1
      %p88 = por %p86, %p87
      %p89 = scmp.ne.s32.totalorder %s80, %s81
      %p90 = scmp.eq.s32.totalorder %s35, 0
      %p91 = por %p89, %p90
      %p92 = scmp.ne.s32.totalorder %s80, %s81
      %p93 = scmp.eq.s32.totalorder %s36, 1
      %p94 = por %p92, %p93
      %p96 = scmp.ne.s32.totalorder %s81, %s95
      %p97 = scmp.eq.s32.totalorder %s36, 0
      %p98 = por %p96, %p97
      %s100 = sadd.s32 %s99, 1
      %p103 = scmp.eq.s32.totalorder %s30, 1
      %p104 = scmp.ne.s32.totalorder %s99, %s101
      %p105 = scmp.eq.s32.totalorder %s30, 0
      %p106 = por %p104, %p105
      %p107 = scmp.ne.s32.totalorder %s99, %s101
      %p108 = scmp.eq.s32.totalorder %s35, 1
      %p109 = por %p107, %p108
      %p110 = scmp.ne.s32.totalorder %s101, %s102
      %p111 = scmp.eq.s32.totalorder %s35, 0
      %p112 = por %p110, %p111
      %p113 = scmp.ne.s32.totalorder %s101, %s102
      %p114 = scmp.eq.s32.totalorder %s36, 1
      %p115 = por %p113, %p114
      %p117 = scmp.ne.s32.totalorder %s102, %s116
      %p118 = scmp.eq.s32.totalorder %s36, 0
      %p119 = por %p117, %p118
      %s121 = sadd.s32 %s120, 1
      %p124 = scmp.eq.s32.totalorder %s30, 1
      %p125 = scmp.ne.s32.totalorder %s120, %s122
      %p126 = scmp.eq.s32.totalorder %s30, 0
      %p127 = por %p125, %p126
      %p128 = scmp.ne.s32.totalorder %s120, %s122
      %p129 = scmp.eq.s32.totalorder %s35, 1
      %p130 = por %p128, %p129
      %p131 = scmp.ne.s32.totalorder %s122, %s123
      %p132 = scmp.eq.s32.totalorder %s35, 0
      %p133 = por %p131, %p132
      %p134 = scmp.ne.s32.totalorder %s122, %s123
      %p135 = scmp.eq.s32.totalorder %s36, 1
      %p136 = por %p134, %p135
      %p138 = scmp.ne.s32.totalorder %s123, %s137
      %p139 = scmp.eq.s32.totalorder %s36, 0
      %p140 = por %p138, %p139
      %s142 = sadd.s32 %s141, 1
      %p145 = scmp.eq.s32.totalorder %s30, 1
      %p146 = scmp.ne.s32.totalorder %s141, %s143
      %p147 = scmp.eq.s32.totalorder %s30, 0
      %p148 = por %p146, %p147
      %p149 = scmp.ne.s32.totalorder %s141, %s143
      %p150 = scmp.eq.s32.totalorder %s35, 1
      %p151 = por %p149, %p150
      %p152 = scmp.ne.s32.totalorder %s143, %s144
      %p153 = scmp.eq.s32.totalorder %s35, 0
      %p154 = por %p152, %p153
      %p155 = scmp.ne.s32.totalorder %s143, %s144
      %p156 = scmp.eq.s32.totalorder %s36, 1
      %p157 = por %p155, %p156
      %p159 = scmp.ne.s32.totalorder %s144, %s158
      %p160 = scmp.eq.s32.totalorder %s36, 0
      %p161 = por %p159, %p160
      %s163 = sadd.s32 %s162, 1
      %p166 = scmp.eq.s32.totalorder %s30, 1
      %p167 = scmp.ne.s32.totalorder %s162, %s164
      %p168 = scmp.eq.s32.totalorder %s30, 0
      %p169 = por %p167, %p168
      %p170 = scmp.ne.s32.totalorder %s162, %s164
      %p171 = scmp.eq.s32.totalorder %s35, 1
      %p172 = por %p170, %p171
      %p173 = scmp.ne.s32.totalorder %s164, %s165
      %p174 = scmp.eq.s32.totalorder %s35, 0
      %p175 = por %p173, %p174
      %p176 = scmp.ne.s32.totalorder %s164, %s165
      %p177 = scmp.eq.s32.totalorder %s36, 1
      %p178 = por %p176, %p177
      %p180 = scmp.ne.s32.totalorder %s165, %s179
      %p181 = scmp.eq.s32.totalorder %s36, 0
      %p182 = por %p180, %p181
      %s184 = sadd.s32 %s183, 1
      %p187 = scmp.eq.s32.totalorder %s30, 1
      %p188 = scmp.ne.s32.totalorder %s183, %s185
      %p189 = scmp.eq.s32.totalorder %s30, 0
      %p190 = por %p188, %p189
      %p191 = scmp.ne.s32.totalorder %s183, %s185
      %p192 = scmp.eq.s32.totalorder %s35, 1
      %p193 = por %p191, %p192
      %p194 = scmp.ne.s32.totalorder %s185, %s186
      %p195 = scmp.eq.s32.totalorder %s35, 0
      %p196 = por %p194, %p195
      %p197 = scmp.ne.s32.totalorder %s185, %s186
      %p198 = scmp.eq.s32.totalorder %s36, 1
      %p199 = por %p197, %p198
      %p201 = scmp.ne.s32.totalorder %s186, %s200
      %p202 = scmp.eq.s32.totalorder %s36, 0
      %p203 = por %p201, %p202
      %s204 = ssub.s32 %s37, %s49
      %s205 = ssub.s32 %s38, %s45
      %s206 = sor.u32 %s204, %s205
      %p207 = scmp.eq.s32.totalorder %s206, 0
      %s209 = sadd.s32 %s208, 1
      %s210 = scalar_select %p207, %s208, %s209
      %p213 = pneg %p207
      %p214 = scmp.eq.s32.totalorder %s30, 1
      %p215 = por %p213, %p214
      %p216 = scmp.ne.s32.totalorder %s208, %s211
      %p217 = scmp.eq.s32.totalorder %s30, 0
      %p218 = por %p216, %p217
      %p219 = scmp.ne.s32.totalorder %s208, %s211
      %p220 = scmp.eq.s32.totalorder %s35, 1
      %p221 = por %p219, %p220
      %p222 = scmp.ne.s32.totalorder %s211, %s212
      %p223 = scmp.eq.s32.totalorder %s35, 0
      %p224 = por %p222, %p223
      %p225 = scmp.ne.s32.totalorder %s211, %s212
      %p226 = scmp.eq.s32.totalorder %s36, 1
      %p227 = por %p225, %p226
      %p229 = scmp.ne.s32.totalorder %s212, %s228
      %p230 = scmp.eq.s32.totalorder %s36, 0
      %p231 = por %p229, %p230
      %s232 = ssub.s32 %s37, %s49
      %s233 = ssub.s32 %s38, %s45
      %s234 = sor.u32 %s232, %s233
      %p235 = scmp.eq.s32.totalorder %s234, 0
      %s237 = sadd.s32 %s236, 1
      %s238 = scalar_select %p235, %s236, %s237
      %p241 = pneg %p235
      %p242 = scmp.eq.s32.totalorder %s30, 1
      %p243 = por %p241, %p242
      %p244 = scmp.ne.s32.totalorder %s236, %s239
      %p245 = scmp.eq.s32.totalorder %s30, 0
      %p246 = por %p244, %p245
      %p247 = scmp.ne.s32.totalorder %s236, %s239
      %p248 = scmp.eq.s32.totalorder %s35, 1
      %p249 = por %p247, %p248
      %p250 = scmp.ne.s32.totalorder %s239, %s240
      %p251 = scmp.eq.s32.totalorder %s35, 0
      %p252 = por %p250, %p251
      %p253 = scmp.ne.s32.totalorder %s239, %s240
      %p254 = scmp.eq.s32.totalorder %s36, 1
      %p255 = por %p253, %p254
      %p257 = scmp.ne.s32.totalorder %s240, %s256
      %p258 = scmp.eq.s32.totalorder %s36, 0
      %p259 = por %p257, %p258
      %s260 = ssub.s32 %s37, %s49
      %s261 = ssub.s32 %s38, %s45
      %s262 = sor.u32 %s260, %s261
      %p263 = scmp.eq.s32.totalorder %s262, 0
      %s265 = sadd.s32 %s264, 1
      %s266 = scalar_select %p263, %s264, %s265
      %p269 = pneg %p263
      %p270 = scmp.eq.s32.totalorder %s30, 1
      %p271 = por %p269, %p270
      %p272 = scmp.ne.s32.totalorder %s264, %s267
      %p273 = scmp.eq.s32.totalorder %s30, 0
      %p274 = por %p272, %p273
      %p275 = scmp.ne.s32.totalorder %s264, %s267
      %p276 = scmp.eq.s32.totalorder %s35, 1
      %p277 = por %p275, %p276
      %p278 = scmp.ne.s32.totalorder %s267, %s268
      %p279 = scmp.eq.s32.totalorder %s35, 0
      %p280 = por %p278, %p279
      %p281 = scmp.ne.s32.totalorder %s267, %s268
      %p282 = scmp.eq.s32.totalorder %s36, 1
      %p283 = por %p281, %p282
      %p285 = scmp.ne.s32.totalorder %s268, %s284
      %p286 = scmp.eq.s32.totalorder %s36, 0
      %p287 = por %p285, %p286
      %s288 = ssub.s32 %s37, %s49
      %s289 = ssub.s32 %s38, %s45
      %s290 = sor.u32 %s288, %s289
      %p291 = scmp.eq.s32.totalorder %s290, 0
      %s293 = sadd.s32 %s292, 1
      %s294 = scalar_select %p291, %s292, %s293
      %p297 = pneg %p291
      %p298 = scmp.eq.s32.totalorder %s30, 1
      %p299 = por %p297, %p298
      %p300 = scmp.ne.s32.totalorder %s292, %s295
      %p301 = scmp.eq.s32.totalorder %s30, 0
      %p302 = por %p300, %p301
      %p303 = scmp.ne.s32.totalorder %s292, %s295
      %p304 = scmp.eq.s32.totalorder %s35, 1
      %p305 = por %p303, %p304
      %p306 = scmp.ne.s32.totalorder %s295, %s296
      %p307 = scmp.eq.s32.totalorder %s35, 0
      %p308 = por %p306, %p307
      %p309 = scmp.ne.s32.totalorder %s295, %s296
      %p310 = scmp.eq.s32.totalorder %s36, 1
      %p311 = por %p309, %p310
      %p313 = scmp.ne.s32.totalorder %s296, %s312
      %p314 = scmp.eq.s32.totalorder %s36, 0
      %p315 = por %p313, %p314
      %s316 = ssub.s32 %s37, %s49
      %p317 = scmp.eq.s32.totalorder %s316, 0
      %s319 = sadd.s32 %s318, 1
      %s320 = scalar_select %p317, %s318, %s319
      %p323 = pneg %p317
      %p324 = scmp.eq.s32.totalorder %s30, 1
      %p325 = por %p323, %p324
      %p326 = scmp.ne.s32.totalorder %s318, %s321
      %p327 = scmp.eq.s32.totalorder %s30, 0
      %p328 = por %p326, %p327
      %p329 = scmp.ne.s32.totalorder %s318, %s321
      %p330 = scmp.eq.s32.totalorder %s35, 1
      %p331 = por %p329, %p330
      %p332 = scmp.ne.s32.totalorder %s321, %s322
      %p333 = scmp.eq.s32.totalorder %s35, 0
      %p334 = por %p332, %p333
      %p335 = scmp.ne.s32.totalorder %s321, %s322
      %p336 = scmp.eq.s32.totalorder %s36, 1
      %p337 = por %p335, %p336
      %p339 = scmp.ne.s32.totalorder %s322, %s338
      %p340 = scmp.eq.s32.totalorder %s36, 0
      %p341 = por %p339, %p340
      %s342 = ssub.s32 %s37, %s49
      %p343 = scmp.eq.s32.totalorder %s342, 0
      %s345 = sadd.s32 %s344, 1
      %s346 = scalar_select %p343, %s344, %s345
      %p349 = pneg %p343
      %p350 = scmp.eq.s32.totalorder %s30, 1
      %p351 = por %p349, %p350
      %p352 = scmp.ne.s32.totalorder %s344, %s347
      %p353 = scmp.eq.s32.totalorder %s30, 0
      %p354 = por %p352, %p353
      %p355 = scmp.ne.s32.totalorder %s344, %s347
      %p356 = scmp.eq.s32.totalorder %s35, 1
      %p357 = por %p355, %p356
      %p358 = scmp.ne.s32.totalorder %s347, %s348
      %p359 = scmp.eq.s32.totalorder %s35, 0
      %p360 = por %p358, %p359
      %p361 = scmp.ne.s32.totalorder %s347, %s348
      %p362 = scmp.eq.s32.totalorder %s36, 1
      %p363 = por %p361, %p362
      %p365 = scmp.ne.s32.totalorder %s348, %s364
      %p366 = scmp.eq.s32.totalorder %s36, 0
      %p367 = por %p365, %p366
      %s368 = ssub.s32 %s37, %s49
      %p369 = scmp.eq.s32.totalorder %s368, 0
      %s371 = sadd.s32 %s370, 1
      %s372 = scalar_select %p369, %s370, %s371
      %p375 = pneg %p369
      %p376 = scmp.eq.s32.totalorder %s30, 1
      %p377 = por %p375, %p376
      %p378 = scmp.ne.s32.totalorder %s370, %s373
      %p379 = scmp.eq.s32.totalorder %s30, 0
      %p380 = por %p378, %p379
      %p381 = scmp.ne.s32.totalorder %s370, %s373
      %p382 = scmp.eq.s32.totalorder %s35, 1
      %p383 = por %p381, %p382
      %p384 = scmp.ne.s32.totalorder %s373, %s374
      %p385 = scmp.eq.s32.totalorder %s35, 0
      %p386 = por %p384, %p385
      %p387 = scmp.ne.s32.totalorder %s373, %s374
      %p388 = scmp.eq.s32.totalorder %s36, 1
      %p389 = por %p387, %p388
      %p391 = scmp.ne.s32.totalorder %s374, %s390
      %p392 = scmp.eq.s32.totalorder %s36, 0
      %p393 = por %p391, %p392
      %p394 = scmp.le.s32.totalorder 1, %s30
      %p395 = scmp.lt.s32.totalorder %s30, 3
      %p396 = pnand %p394, %p395
      %p397 = pneg %p396
      // Predicated region
      $region9: #{tpu_custom_call.1} parent=5 // pred_check
        _
      $region10: #{tpu_custom_call.1} parent=5 // pred_check_branch
        %399 = sbr.rel (%p396) target = $region12
      $region11: #{tpu_custom_call.1} parent=5 // pred_region
        %s400 = ssub.s32 %s30, 1
        // Predicated region
        $region13: #{tpu_custom_call.1} parent=11 // pred_check
          %p401 = pneg %p91
        $region14: #{tpu_custom_call.1} parent=11 // pred_check_branch
          %403 = sbr.rel (%p401) target = $region16
        $region15: #{tpu_custom_call.1} parent=11 // pred_region
          %405 = vsyncadd [#allocation4], 0
          %s407 = sshll.u32 %s1, 4
          %s408 = int_to_ptr.hbm [resolvable:$true] %s407
          %s409 = sshll.u32 [#allocation3], 4
          %s410 = int_to_ptr.vmem [resolvable:$true] %s409
          %412 = dma.hbm_to_vmem [thread:$0]  %s408, 16, %s410, [#allocation4]
        $region16: #{tpu_custom_call.1} parent=11 // pred_fallthru
          _
        // Predicated region
        $region17: #{tpu_custom_call.1} parent=11 // pred_check
          %p413 = pneg %p112
        $region18: #{tpu_custom_call.1} parent=11 // pred_check_branch
          %415 = sbr.rel (%p413) target = $region20
        $region19: #{tpu_custom_call.1} parent=11 // pred_region
          _
        $region20: #{tpu_custom_call.1} parent=11 // pred_fallthru
          _
        // Predicated region
        $region21: #{tpu_custom_call.1} parent=11 // pred_check
          %p416 = pneg %p133
        $region22: #{tpu_custom_call.1} parent=11 // pred_check_branch
          %418 = sbr.rel (%p416) target = $region24
        $region23: #{tpu_custom_call.1} parent=11 // pred_region
          %420 = vsyncadd [#allocation7], 0
          %s422 = sshll.u32 %s3, 4
          %s423 = int_to_ptr.hbm [resolvable:$true] %s422
          %s424 = sshll.u32 [#allocation6], 4
          %s425 = int_to_ptr.vmem [resolvable:$true] %s424
          %427 = dma.hbm_to_vmem [thread:$0]  %s423, 32, %s425, [#allocation7]
        $region24: #{tpu_custom_call.1} parent=11 // pred_fallthru
          _
        // Predicated region
        $region25: #{tpu_custom_call.1} parent=11 // pred_check
          %p428 = pneg %p154
        $region26: #{tpu_custom_call.1} parent=11 // pred_check_branch
          %430 = sbr.rel (%p428) target = $region28
        $region27: #{tpu_custom_call.1} parent=11 // pred_region
          _
        $region28: #{tpu_custom_call.1} parent=11 // pred_fallthru
          _
        // Predicated region
        $region29: #{tpu_custom_call.1} parent=11 // pred_check
          %p431 = pneg %p175
        $region30: #{tpu_custom_call.1} parent=11 // pred_check_branch
          %433 = sbr.rel (%p431) target = $region32
        $region31: #{tpu_custom_call.1} parent=11 // pred_region
          _
        $region32: #{tpu_custom_call.1} parent=11 // pred_fallthru
          _
        // Predicated region
        $region33: #{tpu_custom_call.1} parent=11 // pred_check
          %p434 = pneg %p196
        $region34: #{tpu_custom_call.1} parent=11 // pred_check_branch
          %436 = sbr.rel (%p434) target = $region36
        $region35: #{tpu_custom_call.1} parent=11 // pred_region
          _
        $region36: #{tpu_custom_call.1} parent=11 // pred_fallthru
          _
      $region12: #{tpu_custom_call.1} parent=5 // pred_fallthru
        _
      %p437 = scmp.lt.s32.totalorder %s30, 2
      // Predicated region
      $region37: #{tpu_custom_call.1} parent=5 // pred_check
        %p438 = pneg %p437
      $region38: #{tpu_custom_call.1} parent=5 // pred_check_branch
        %440 = sbr.rel (%p438) target = $region40
      $region39: #{tpu_custom_call.1} parent=5 // pred_region
        // Predicated region
        $region41: #{tpu_custom_call.1} parent=39 // pred_check
          %p441 = pneg %p64
        $region42: #{tpu_custom_call.1} parent=39 // pred_check_branch
          %443 = sbr.rel (%p441) target = $region44
        $region43: #{tpu_custom_call.1} parent=39 // pred_region
          %s444 = smul.u32 2, %s38
          %p445 = scmp.lt.s32.totalorder %s37, 1
          %s446 = scalar_select %p445, %s37, 1
          %p447 = scmp.lt.s32.totalorder %s444, 1
          %s448 = scalar_select %p447, %s444, 1
          %s449 = smul.addr %s446, 2
          %s450 = sadd.s32 %s448, %s449
          %s451 = smul.addr %s450, 4
          %s452 = scalar_lea.vmem %s0, %s451
          %s453 = smul.u32 2, %s38
        $region44: #{tpu_custom_call.1} parent=39 // pred_fallthru
          _
        // Predicated region
        $region45: #{tpu_custom_call.1} parent=39 // pred_check
          %p454 = pneg %p218
        $region46: #{tpu_custom_call.1} parent=39 // pred_check_branch
          %456 = sbr.rel (%p454) target = $region48
        $region47: #{tpu_custom_call.1} parent=39 // pred_region
          %s457 = smul.u32 2, %s38
          %p458 = scmp.lt.s32.totalorder %s37, 1
          %s459 = scalar_select %p458, %s37, 1
          %p460 = scmp.lt.s32.totalorder %s457, 1
          %s461 = scalar_select %p460, %s457, 1
          %s462 = smul.addr %s459, 2
          %s463 = sadd.s32 %s461, %s462
          %s464 = scalar_lea.vmem %s7, %s463
          %s465 = smul.u32 2, %s38
        $region48: #{tpu_custom_call.1} parent=39 // pred_fallthru
          _
        // Predicated region
        $region49: #{tpu_custom_call.1} parent=39 // pred_check
          %p466 = pneg %p246
        $region50: #{tpu_custom_call.1} parent=39 // pred_check_branch
          %468 = sbr.rel (%p466) target = $region52
        $region51: #{tpu_custom_call.1} parent=39 // pred_region
          %s469 = smul.u32 2, %s38
          %p470 = scmp.lt.s32.totalorder %s37, 1
          %s471 = scalar_select %p470, %s37, 1
          %p472 = scmp.lt.s32.totalorder %s469, 1
          %s473 = scalar_select %p472, %s469, 1
          %s474 = smul.addr %s471, 2
          %s475 = sadd.s32 %s473, %s474
          %s476 = scalar_lea.vmem %s8, %s475
          %s477 = smul.u32 2, %s38
        $region52: #{tpu_custom_call.1} parent=39 // pred_fallthru
          _
        // Predicated region
        $region53: #{tpu_custom_call.1} parent=39 // pred_check
          %p478 = pneg %p274
        $region54: #{tpu_custom_call.1} parent=39 // pred_check_branch
          %480 = sbr.rel (%p478) target = $region56
        $region55: #{tpu_custom_call.1} parent=39 // pred_region
          %s481 = smul.u32 2, %s38
          %p482 = scmp.lt.s32.totalorder %s37, 1
          %s483 = scalar_select %p482, %s37, 1
          %p484 = scmp.lt.s32.totalorder %s481, 1
          %s485 = scalar_select %p484, %s481, 1
          %s486 = smul.addr %s483, 2
          %s487 = sadd.s32 %s485, %s486
          %s488 = scalar_lea.vmem %s9, %s487
          %s489 = smul.u32 2, %s38
        $region56: #{tpu_custom_call.1} parent=39 // pred_fallthru
          _
      $region40: #{tpu_custom_call.1} parent=5 // pred_fallthru
        _
      %p490 = scmp.le.s32.totalorder 1, %s30
      %p491 = scmp.lt.s32.totalorder %s30, 3
      %p492 = pnand %p490, %p491
      %p493 = pneg %p492
      // Predicated region
      $region57: #{tpu_custom_call.1} parent=5 // pred_check
        _
      $region58: #{tpu_custom_call.1} parent=5 // pred_check_branch
        %495 = sbr.rel (%p492) target = $region60
      $region59: #{tpu_custom_call.1} parent=5 // pred_region
        %s496 = ssub.s32 %s30, 1
        // Predicated region
        $region61: #{tpu_custom_call.1} parent=59 // pred_check
          %p497 = pneg %p91
        $region62: #{tpu_custom_call.1} parent=59 // pred_check_branch
          %499 = sbr.rel (%p497) target = $region64
        $region63: #{tpu_custom_call.1} parent=59 // pred_region
          %501 = dma.done [#allocation4], 16
        $region64: #{tpu_custom_call.1} parent=59 // pred_fallthru
          _
        // Predicated region
        $region65: #{tpu_custom_call.1} parent=59 // pred_check
          %p502 = pneg %p133
        $region66: #{tpu_custom_call.1} parent=59 // pred_check_branch
          %504 = sbr.rel (%p502) target = $region68
        $region67: #{tpu_custom_call.1} parent=59 // pred_region
          %506 = dma.done [#allocation7], 32
        $region68: #{tpu_custom_call.1} parent=59 // pred_fallthru
          _
        %s507 = smul.u32 2, %s40
        %p508 = scmp.lt.s32.totalorder %s39, 1
        %s509 = scalar_select %p508, %s39, 1
        %p510 = scmp.lt.s32.totalorder %s507, 1
        %s511 = scalar_select %p510, %s507, 1
        %s512 = smul.addr %s509, 2
        %s513 = sadd.s32 %s511, %s512
        %s514 = smul.addr %s513, 4
        %s515 = scalar_lea.vmem %s0, %s514
        %p516 = pneg %p70
        %p517 = pneg %p67
        %p518 = pneg %p91
        %p519 = pneg %p88
        %p520 = pneg %p112
        %p521 = pneg %p109
        %p522 = pneg %p133
        %p523 = pneg %p130
        %p524 = pneg %p154
        %p525 = pneg %p151
        %p526 = pneg %p175
        %p527 = pneg %p172
        %p528 = pneg %p196
        %p529 = pneg %p193
        %s530 = smul.u32 2, %s40
        %p531 = scmp.lt.s32.totalorder %s39, 1
        %s532 = scalar_select %p531, %s39, 1
        %p533 = scmp.lt.s32.totalorder %s530, 1
        %s534 = scalar_select %p533, %s530, 1
        %s535 = smul.addr %s532, 2
        %s536 = sadd.s32 %s534, %s535
        %s537 = scalar_lea.vmem %s7, %s536
        %p538 = pneg %p224
        %p539 = pneg %p221
        %s540 = smul.u32 2, %s40
        %p541 = scmp.lt.s32.totalorder %s39, 1
        %s542 = scalar_select %p541, %s39, 1
        %p543 = scmp.lt.s32.totalorder %s540, 1
        %s544 = scalar_select %p543, %s540, 1
        %s545 = smul.addr %s542, 2
        %s546 = sadd.s32 %s544, %s545
        %s547 = scalar_lea.vmem %s8, %s546
        %p548 = pneg %p252
        %p549 = pneg %p249
        %s550 = smul.u32 2, %s40
        %p551 = scmp.lt.s32.totalorder %s39, 1
        %s552 = scalar_select %p551, %s39, 1
        %p553 = scmp.lt.s32.totalorder %s550, 1
        %s554 = scalar_select %p553, %s550, 1
        %s555 = smul.addr %s552, 2
        %s556 = sadd.s32 %s554, %s555
        %s557 = scalar_lea.vmem %s9, %s556
        %p558 = pneg %p280
        %p559 = pneg %p277
        %p560 = pneg %p308
        %p561 = pneg %p305
        %s562 = sand.u32 %s295, 1
        %s563 = scalar_lea.sflag [#allocation5], %s562
        %s564 = sand.u32 %s295, 1
        %s565 = smul.addr %s564, 2
        %s566 = scalar_lea.vmem [#allocation8], %s565
        %p567 = pneg %p334
        %p568 = pneg %p331
        %s569 = sand.u32 %s321, 1
        %s570 = scalar_lea.sflag [#allocation10], %s569
        %s571 = sand.u32 %s321, 1
        %s572 = scalar_lea.vmem [#allocation9], %s571
        %p573 = pneg %p360
        %p574 = pneg %p357
        %p575 = scmp.lt.s32.totalorder %s39, 1
        %s576 = scalar_select %p575, %s39, 1
        %s577 = smul.addr %s576, 8
        %s578 = scalar_lea.vmem %s12, %s577
        %p579 = pneg %p386
        %p580 = pneg %p383
        %p581 = scmp.lt.s32.totalorder %s39, 1
        %s582 = scalar_select %p581, %s39, 1
        %s583 = smul.addr %s582, 8
        %s584 = scalar_lea.vmem %s13, %s583
        %s585 = smul.u32 2, %s40
        %p586 = scmp.lt.s32.totalorder %s39, 1
        %s587 = scalar_select %p586, %s39, 1
        %p588 = scmp.lt.s32.totalorder %s585, 1
        %s589 = scalar_select %p588, %s585, 1
        %s590 = smul.addr %s587, 2
        %s591 = sadd.s32 %s589, %s590
        %s592 = smul.addr %s591, 4
        %s593 = scalar_lea.vmem %s0, %s592
        %s594 = smul.u32 2, %s40
        %s595 = smul.u32 2, %s40
        %p596 = scmp.lt.s32.totalorder %s39, 1
        %s597 = scalar_select %p596, %s39, 1
        %p598 = scmp.lt.s32.totalorder %s595, 1
        %s599 = scalar_select %p598, %s595, 1
        %s600 = smul.addr %s597, 2
        %s601 = sadd.s32 %s599, %s600
        %s602 = scalar_lea.vmem %s7, %s601
        %s603 = smul.u32 2, %s40
        %s604 = smul.u32 2, %s40
        %p605 = scmp.lt.s32.totalorder %s39, 1
        %s606 = scalar_select %p605, %s39, 1
        %p607 = scmp.lt.s32.totalorder %s604, 1
        %s608 = scalar_select %p607, %s604, 1
        %s609 = smul.addr %s606, 2
        %s610 = sadd.s32 %s608, %s609
        %s611 = scalar_lea.vmem %s8, %s610
        %s612 = smul.u32 2, %s40
        %s613 = smul.u32 2, %s40
        %p614 = scmp.lt.s32.totalorder %s39, 1
        %s615 = scalar_select %p614, %s39, 1
        %p616 = scmp.lt.s32.totalorder %s613, 1
        %s617 = scalar_select %p616, %s613, 1
        %s618 = smul.addr %s615, 2
        %s619 = sadd.s32 %s617, %s618
        %s620 = scalar_lea.vmem %s9, %s619
        %s621 = smul.u32 2, %s40
        %s622 = smul.u32 2, %s40
        %p623 = scmp.lt.s32.totalorder %s39, 1
        %s624 = scalar_select %p623, %s39, 1
        %s625 = smul.addr %s624, 8
        %s626 = scalar_lea.vmem %s12, %s625
        %p627 = scmp.lt.s32.totalorder %s39, 1
        %s628 = scalar_select %p627, %s39, 1
        %s629 = smul.addr %s628, 8
        %s630 = scalar_lea.vmem %s13, %s629
        %p631 = scmp.eq.s32.totalorder %s40, 0
        // Predicated region
        $region69: #{tpu_custom_call.1} parent=59 // pred_check
          %p632 = pneg %p631
        $region70: #{tpu_custom_call.1} parent=59 // pred_check_branch
          %634 = sbr.rel (%p632) target = $region72
        $region71: #{tpu_custom_call.1} parent=59 // pred_region
          %vm635 = vcmask 57344
          %636 = vst.msk [vmem:[%s572] sm:$0x1] %vm635, 0.0
          %vm637 = vcmask 7168
          %638 = vst.msk [vmem:[%s626] sm:$0xff] %vm637, 0.0
          %vm639 = vcmask 15360
          %640 = vst.msk [vmem:[%s630] sm:$0xff] %vm639, 0.0
        $region72: #{tpu_custom_call.1} parent=59 // pred_fallthru
          _
        %v641 = vlaneseq
        %v642 = vand.u32 %v641, 127
        %v643 = vadd.s32 %v642, 128
        %s644 = smul.u32 %s40, 256
        %v645 = vstv %s644
        %v646 = vadd.s32 %v645, %v642
        %v647 = vadd.s32 %v645, %v643
        %vm648 = vcmp.lt.s32.totalorder %v646, 256
        %vm649 = vcmp.lt.s32.totalorder %v647, 256
        %v650 = vsel %vm648, 1, 0
        %v651 = vsel %vm649, 1, 0
        %v652 = vcvt.s32.f32 %v650
        %v653 = vcvt.s32.f32 %v651
        %v654 = vld [vmem:[%s593] sm:$0xff]
        %vm655 = vcmp.eq.s32.totalorder %v650, 1
        %vm656 = vcmp.eq.s32.totalorder %v651, 1
        %658 = vst [vmem:[#allocation1] ss:$2 sm:$0xff] %v654
        %v659 = vld.sshfl [vmem:[#allocation1] sm:$0xff pattern:$0x75316420]
        %v660 = vld.sshfl [vmem:[#allocation1 + $0x8] sm:$0xff pattern:$0x75316420]
        %v663 = vsel %vm655, %v659, 0.0
        %v664 = vsel %vm656, %v660, 0.0
        %v665 = vld [vmem:[#allocation3] sm:$0x1]
        %v666 = vld [vmem:[#allocation2] sm:$0x1]
        %668 = vset.pattern.permute.xlu0 0
        %669 = vperm.xlu0 %668, %v666
        %v670 = vpop.permute.xlu0 %669
        %v672 = vperm.slane %v670, 0
        %vm673 = vcmask 31744
        %v675 = vsel %vm673, %v665, 0
        %vm677 = vcmask 1043456
        %v679 = vsel %vm677, %v663, 0
        %v682 = vsel %vm677, %v664, 0
        %684 = vmatpush.msra.mxu0 0.0
        %685 = vmatpush.msra.mxu0 0.0
        %686 = vmatpush.msra.mxu0 0.0
        %687 = vmatpush.msra.mxu0 0.0
        %688 = vmatpush.msra.mxu0 0.0
        %689 = vmatpush.msra.mxu0 0.0
        %690 = vmatpush.msra.mxu0 0.0
        %691 = vmatpush.msra.mxu0 0.0
        %692 = vmatpush.msra.mxu0 0.0
        %693 = vmatpush.msra.mxu0 0.0
        %694 = vmatpush.msra.mxu0 0.0
        %695 = vmatpush.msra.mxu0 0.0
        %696 = vmatpush.msra.mxu0 0.0
        %697 = vmatpush.msra.mxu0 0.0
        %698 = vmatpush.msra.mxu0 0.0
        %699 = vmatpush.msra.mxu0 %v679
        %700 = vmatmul.f32.gmra.mxu0 %v675
        %v701 = vpop.f32.mrf.mxu0
        %v702 = vadd.f32 %v672, %v701
        %703 = vdwg.mxu0
        %704 = vmatpush.msra.mxu0 0.0
        %705 = vmatpush.msra.mxu0 0.0
        %706 = vmatpush.msra.mxu0 0.0
        %707 = vmatpush.msra.mxu0 0.0
        %708 = vmatpush.msra.mxu0 0.0
        %709 = vmatpush.msra.mxu0 0.0
        %710 = vmatpush.msra.mxu0 0.0
        %711 = vmatpush.msra.mxu0 0.0
        %712 = vmatpush.msra.mxu0 0.0
        %713 = vmatpush.msra.mxu0 0.0
        %714 = vmatpush.msra.mxu0 0.0
        %715 = vmatpush.msra.mxu0 0.0
        %716 = vmatpush.msra.mxu0 0.0
        %717 = vmatpush.msra.mxu0 0.0
        %718 = vmatpush.msra.mxu0 0.0
        %719 = vmatpush.msra.mxu0 %v682
        %720 = vmatmul.f32.gmra.mxu0 %v675
        %v721 = vpop.f32.mrf.mxu0
        %v722 = vadd.f32 %v672, %v721
        %723 = vdwg.mxu0
        %v724 = vld [vmem:[#allocation6] sm:$0x3]
        %v725 = vld [vmem:[%s4] sm:$0x3]
        %727 = vset.pattern.permute.xlu0 0
        %728 = vperm.xlu0 %727, %v725
        %v729 = vpop.permute.xlu0 %728
        %v732 = vsel %vm673, %v724, 0
        %734 = vmatpush.msra.mxu0 0.0
        %735 = vmatpush.msra.mxu0 0.0
        %736 = vmatpush.msra.mxu0 0.0
        %737 = vmatpush.msra.mxu0 0.0
        %738 = vmatpush.msra.mxu0 0.0
        %739 = vmatpush.msra.mxu0 0.0
        %740 = vmatpush.msra.mxu0 0.0
        %741 = vmatpush.msra.mxu0 0.0
        %742 = vmatpush.msra.mxu0 0.0
        %743 = vmatpush.msra.mxu0 0.0
        %744 = vmatpush.msra.mxu0 0.0
        %745 = vmatpush.msra.mxu0 0.0
        %746 = vmatpush.msra.mxu0 0.0
        %747 = vmatpush.msra.mxu0 0.0
        %748 = vmatpush.msra.mxu0 0.0
        %749 = vmatpush.msra.mxu0 %v679
        %750 = vmatmul.f32.gmra.mxu0 %v732
        %v751 = vpop.f32.mrf.mxu0
        %v752 = vadd.f32 %v729, %v751
        %753 = vdwg.mxu0
        %754 = vmatpush.msra.mxu0 0.0
        %755 = vmatpush.msra.mxu0 0.0
        %756 = vmatpush.msra.mxu0 0.0
        %757 = vmatpush.msra.mxu0 0.0
        %758 = vmatpush.msra.mxu0 0.0
        %759 = vmatpush.msra.mxu0 0.0
        %760 = vmatpush.msra.mxu0 0.0
        %761 = vmatpush.msra.mxu0 0.0
        %762 = vmatpush.msra.mxu0 0.0
        %763 = vmatpush.msra.mxu0 0.0
        %764 = vmatpush.msra.mxu0 0.0
        %765 = vmatpush.msra.mxu0 0.0
        %766 = vmatpush.msra.mxu0 0.0
        %767 = vmatpush.msra.mxu0 0.0
        %768 = vmatpush.msra.mxu0 0.0
        %769 = vmatpush.msra.mxu0 %v682
        %770 = vmatmul.f32.gmra.mxu0 %v732
        %v771 = vpop.f32.mrf.mxu0
        %v772 = vadd.f32 %v729, %v771
        %773 = vdwg.mxu0
        %v774 = vld [vmem:[%s5] sm:$0xff]
        %v775 = vld [vmem:[%s6] sm:$0xff]
        %777 = vset.pattern.permute.xlu0 0
        %778 = vperm.xlu0 %777, %v775
        %v779 = vpop.permute.xlu0 %778
        %v782 = vsel %vm673, %v774, 0
        %784 = vmatpush.msra.mxu0 0.0
        %785 = vmatpush.msra.mxu0 0.0
        %786 = vmatpush.msra.mxu0 0.0
        %787 = vmatpush.msra.mxu0 0.0
        %788 = vmatpush.msra.mxu0 0.0
        %789 = vmatpush.msra.mxu0 0.0
        %790 = vmatpush.msra.mxu0 0.0
        %791 = vmatpush.msra.mxu0 0.0
        %792 = vmatpush.msra.mxu0 0.0
        %793 = vmatpush.msra.mxu0 0.0
        %794 = vmatpush.msra.mxu0 0.0
        %795 = vmatpush.msra.mxu0 0.0
        %796 = vmatpush.msra.mxu0 0.0
        %797 = vmatpush.msra.mxu0 0.0
        %798 = vmatpush.msra.mxu0 0.0
        %799 = vmatpush.msra.mxu0 %v679
        %800 = vmatmul.f32.gmra.mxu0 %v782
        %v801 = vpop.f32.mrf.mxu0
        %v802 = vadd.f32 %v779, %v801
        %803 = vdwg.mxu0
        %804 = vmatpush.msra.mxu0 0.0
        %805 = vmatpush.msra.mxu0 0.0
        %806 = vmatpush.msra.mxu0 0.0
        %807 = vmatpush.msra.mxu0 0.0
        %808 = vmatpush.msra.mxu0 0.0
        %809 = vmatpush.msra.mxu0 0.0
        %810 = vmatpush.msra.mxu0 0.0
        %811 = vmatpush.msra.mxu0 0.0
        %812 = vmatpush.msra.mxu0 0.0
        %813 = vmatpush.msra.mxu0 0.0
        %814 = vmatpush.msra.mxu0 0.0
        %815 = vmatpush.msra.mxu0 0.0
        %816 = vmatpush.msra.mxu0 0.0
        %817 = vmatpush.msra.mxu0 0.0
        %818 = vmatpush.msra.mxu0 0.0
        %819 = vmatpush.msra.mxu0 %v682
        %820 = vmatmul.f32.gmra.mxu0 %v782
        %v821 = vpop.f32.mrf.mxu0
        %v822 = vadd.f32 %v779, %v821
        %823 = vdwg.mxu0
        %v826 = vrot.slane %v722, 7
        %vm827 = vcmask 1040384
        %v828 = vsel %vm827, %v702, %v826
        %v830 = vlaneseq
        %vm831 = vcmp.ge.s32.totalorder %v830, 0
        %vm832 = vcmp.lt.s32.totalorder %v830, 256
        %vm833 = vmand %vm831, %vm832
        %834 = vst.msk [vmem:[%s566] sm:$0x3] %vm833, %v828
        %v835 = vld [vmem:[%s602] sm:$0x3]
        %v837 = vperm.slane %v835, 0
        %v838 = vperm.slane %v835, 1
        %v841 = vsel %vm648, %v837, 0.0
        %v842 = vsel %vm649, %v838, 0.0
        %v843 = vsub.f32 0.0, %v702
        %v844 = vsub.f32 0.0, %v722
        %v845 = vmax.f32 %v843, 0.0
        %v846 = vmax.f32 %v844, 0.0
        %v847 = vand.u32 2147483647, %v702
        %v848 = vand.u32 2147483647, %v722
        %v849 = vsub.f32 0.0, %v847
        %v850 = vsub.f32 0.0, %v848
        %v851 = vmul.f32 %v849, 1.442695
        %v852 = vpow.pop %v851
        %v853 = vmul.f32 %v850, 1.442695
        %v854 = vpow.pop %v853
        %v855 = vadd.f32 %v852, 1.0
        %v856 = vlog2.pop %v855
        %v857 = vmul.f32 %v856, 0.6931472
        %v858 = vmul.f32 -0.5, %v852
        %v859 = vadd.f32 %v858, 1.0
        %v860 = vmul.f32 %v859, %v852
        %v861 = vand.u32 2147483647, %v852
        %vm862 = vcmp.lt.f32.partialorder %v861, 0.0004427343
        %v863 = vsel %vm862, %v860, %v857
        %v864 = vadd.f32 %v854, 1.0
        %v865 = vlog2.pop %v864
        %v866 = vmul.f32 %v865, 0.6931472
        %v867 = vmul.f32 -0.5, %v854
        %v868 = vadd.f32 %v867, 1.0
        %v869 = vmul.f32 %v868, %v854
        %v870 = vand.u32 2147483647, %v854
        %vm871 = vcmp.lt.f32.partialorder %v870, 0.0004427343
        %v872 = vsel %vm871, %v869, %v866
        %v873 = vadd.f32 %v845, %v863
        %v874 = vadd.f32 %v846, %v872
        %v875 = vmul.f32 %v841, 10.0
        %v876 = vmul.f32 %v842, 10.0
        %v877 = vmul.f32 %v875, %v873
        %v878 = vmul.f32 %v876, %v874
        %v879 = vsub.f32 1.0, %v841
        %v880 = vsub.f32 1.0, %v842
        %v881 = vadd.f32 %v702, %v873
        %v882 = vadd.f32 %v722, %v874
        %v883 = vmul.f32 %v879, %v881
        %v884 = vmul.f32 %v880, %v882
        %v885 = vadd.f32 %v877, %v883
        %v886 = vadd.f32 %v878, %v884
        %v887 = vxor.u32 %v702, 2147483648
        %v888 = vxor.u32 %v722, 2147483648
        %v889 = vmul.f32 %v887, 1.442695
        %v890 = vpow.pop %v889
        %v891 = vmul.f32 %v888, 1.442695
        %v892 = vpow.pop %v891
        %v893 = vadd.f32 %v890, 1.0
        %v894 = vadd.f32 %v892, 1.0
        %v895 = vrcp.pop %v893
        %v896 = vmul.f32 %v893, %v895
        %v897 = vsub.f32 1.0, %v896
        %v898 = vmul.f32 %v895, %v897
        %v899 = vadd.f32 %v895, %v898
        %vm900 = vweird.f32 %v893
        %vm901 = vweird.f32 %v895
        %vm902 = vmor %vm900, %vm901
        %v903 = vsel %vm902, %v895, %v899
        %v904 = vand.u32 2147483647, %v893
        %vm905 = vcmp.eq.f32.partialorder %v904, 8.507059e+37
        %v906 = vand.u32 %v893, 2147483648
        %v907 = vor.u32 1.1754944e-38, %v906
        %v908 = vsel %vm905, %v907, %v903
        %v909 = vmul.f32 1.0, %v908
        %v910 = vrcp.pop %v894
        %v911 = vmul.f32 %v894, %v910
        %v912 = vsub.f32 1.0, %v911
        %v913 = vmul.f32 %v910, %v912
        %v914 = vadd.f32 %v910, %v913
        %vm915 = vweird.f32 %v894
        %vm916 = vweird.f32 %v910
        %vm917 = vmor %vm915, %vm916
        %v918 = vsel %vm917, %v910, %v914
        %v919 = vand.u32 2147483647, %v894
        %vm920 = vcmp.eq.f32.partialorder %v919, 8.507059e+37
        %v921 = vand.u32 %v894, 2147483648
        %v922 = vor.u32 1.1754944e-38, %v921
        %v923 = vsel %vm920, %v922, %v918
        %v924 = vmul.f32 1.0, %v923
        %v925 = vmul.f32 %v885, %v652
        %v926 = vmul.f32 %v886, %v653
        %v927 = vsel %vm827, %v925, 0.0
        %v928 = vsel %vm827, %v926, 0.0
        %v929 = vadd.f32 %v927, %v928
        %930 = vadd.xlane.f32.xlu0 %v929
        %v931 = vpop.xlane.xlu0 %930
        %v932 = vrot.slane %v931, 4
        %v933 = vadd.f32 %v931, %v932
        %v934 = vrot.slane %v933, 2
        %v935 = vadd.f32 %v933, %v934
        %v936 = vrot.slane %v935, 1
        %v937 = vadd.f32 %v935, %v936
        %s938 = vtos %v937
        %v939 = vmul.f32 %v909, %v841
        %v940 = vmul.f32 %v924, %v842
        %v941 = vsel %vm827, %v939, 0.0
        %v942 = vsel %vm827, %v940, 0.0
        %v943 = vadd.f32 %v941, %v942
        %944 = vadd.xlane.f32.xlu0 %v943
        %v945 = vpop.xlane.xlu0 %944
        %v946 = vrot.slane %v945, 4
        %v947 = vadd.f32 %v945, %v946
        %v948 = vrot.slane %v947, 2
        %v949 = vadd.f32 %v947, %v948
        %v950 = vrot.slane %v949, 1
        %v951 = vadd.f32 %v949, %v950
        %s952 = vtos %v951
        %v953 = vadd.f32 %v909, %v841
        %v954 = vadd.f32 %v924, %v842
        %v955 = vmul.f32 %v953, %v652
        %v956 = vmul.f32 %v954, %v653
        %v957 = vsel %vm827, %v955, 0.0
        %v958 = vsel %vm827, %v956, 0.0
        %v959 = vadd.f32 %v957, %v958
        %960 = vadd.xlane.f32.xlu0 %v959
        %v961 = vpop.xlane.xlu0 %960
        %v962 = vrot.slane %v961, 4
        %v963 = vadd.f32 %v961, %v962
        %v964 = vrot.slane %v963, 2
        %v965 = vadd.f32 %v963, %v964
        %v966 = vrot.slane %v965, 1
        %v967 = vadd.f32 %v965, %v966
        %s968 = vtos %v967
        %v969 = vld [vmem:[%s611] sm:$0x3]
        %v970 = vperm.slane %v969, 0
        %v971 = vperm.slane %v969, 1
        %v972 = vsel %vm648, %v970, 255
        %v973 = vsel %vm649, %v971, 255
        %v974 = vlaneseq
        %v975 = vshrl.u32 %v974, 7
        %v976 = vperm.slane %v972, 0
        %v977 = vperm.slane %v973, 0
        %vm978 = vcmp.eq.s32.totalorder %v975, %v976
        %vm979 = vcmp.eq.s32.totalorder %v975, %v977
        %v980 = vsel %vm978, 1, 0
        %v981 = vsel %vm979, 1, 0
        %v982 = vcvt.s32.f32 %v980
        %v983 = vcvt.s32.f32 %v981
        %v984 = vrot.slane %v802, 4
        %v985 = vmax.f32 %v802, %v984
        %v986 = vrot.slane %v985, 2
        %v987 = vmax.f32 %v985, %v986
        %v988 = vrot.slane %v987, 1
        %v989 = vmax.f32 %v987, %v988
        %v990 = vrot.slane %v822, 4
        %v991 = vmax.f32 %v822, %v990
        %v992 = vrot.slane %v991, 2
        %v993 = vmax.f32 %v991, %v992
        %v994 = vrot.slane %v993, 1
        %v995 = vmax.f32 %v993, %v994
        %v996 = vsub.f32 %v802, %v989
        %v997 = vsub.f32 %v822, %v995
        %v998 = vmul.f32 %v996, 1.442695
        %v999 = vpow.pop %v998
        %v1000 = vmul.f32 %v997, 1.442695
        %v1001 = vpow.pop %v1000
        %v1002 = vrot.slane %v999, 4
        %v1003 = vadd.f32 %v999, %v1002
        %v1004 = vrot.slane %v1003, 2
        %v1005 = vadd.f32 %v1003, %v1004
        %v1006 = vrot.slane %v1005, 1
        %v1007 = vadd.f32 %v1005, %v1006
        %v1008 = vrot.slane %v1001, 4
        %v1009 = vadd.f32 %v1001, %v1008
        %v1010 = vrot.slane %v1009, 2
        %v1011 = vadd.f32 %v1009, %v1010
        %v1012 = vrot.slane %v1011, 1
        %v1013 = vadd.f32 %v1011, %v1012
        %v1014 = vlog2.pop %v1007
        %v1015 = vmul.f32 %v1014, 0.6931472
        %v1016 = vlog2.pop %v1013
        %v1017 = vmul.f32 %v1016, 0.6931472
        %v1018 = vadd.f32 %v989, %v1015
        %v1019 = vadd.f32 %v995, %v1017
        %v1020 = vmul.f32 %v802, %v982
        %v1021 = vmul.f32 %v822, %v983
        %v1022 = vrot.slane %v1020, 4
        %v1023 = vadd.f32 %v1020, %v1022
        %v1024 = vrot.slane %v1023, 2
        %v1025 = vadd.f32 %v1023, %v1024
        %v1026 = vrot.slane %v1025, 1
        %v1027 = vadd.f32 %v1025, %v1026
        %v1028 = vrot.slane %v1021, 4
        %v1029 = vadd.f32 %v1021, %v1028
        %v1030 = vrot.slane %v1029, 2
        %v1031 = vadd.f32 %v1029, %v1030
        %v1032 = vrot.slane %v1031, 1
        %v1033 = vadd.f32 %v1031, %v1032
        %vm1034 = vcmp.ne.s32.totalorder %v972, 255
        %vm1035 = vcmp.ne.s32.totalorder %v973, 255
        %v1036 = vsel %vm1034, 1, 0
        %v1037 = vsel %vm1035, 1, 0
        %v1038 = vcvt.s32.f32 %v1036
        %v1039 = vcvt.s32.f32 %v1037
        %v1040 = vsub.f32 %v1018, %v1027
        %v1041 = vsub.f32 %v1019, %v1033
        %v1042 = vmul.f32 %v1040, %v1038
        %v1043 = vmul.f32 %v1041, %v1039
        %v1044 = vsel %vm827, %v1042, 0.0
        %v1045 = vsel %vm827, %v1043, 0.0
        %v1046 = vadd.f32 %v1044, %v1045
        %1047 = vadd.xlane.f32.xlu0 %v1046
        %v1048 = vpop.xlane.xlu0 %1047
        %v1049 = vrot.slane %v1048, 4
        %v1050 = vadd.f32 %v1048, %v1049
        %v1051 = vrot.slane %v1050, 2
        %v1052 = vadd.f32 %v1050, %v1051
        %v1053 = vrot.slane %v1052, 1
        %v1054 = vadd.f32 %v1052, %v1053
        %s1055 = vtos %v1054
        %v1056 = vsel %vm827, %v1038, 0.0
        %v1057 = vsel %vm827, %v1039, 0.0
        %v1058 = vadd.f32 %v1056, %v1057
        %1059 = vadd.xlane.f32.xlu0 %v1058
        %v1060 = vpop.xlane.xlu0 %1059
        %v1061 = vrot.slane %v1060, 4
        %v1062 = vadd.f32 %v1060, %v1061
        %v1063 = vrot.slane %v1062, 2
        %v1064 = vadd.f32 %v1062, %v1063
        %v1065 = vrot.slane %v1064, 1
        %v1066 = vadd.f32 %v1064, %v1065
        %s1067 = vtos %v1066
        %v1068 = vld [vmem:[%s620] sm:$0x3]
        %v1069 = vperm.slane %v1068, 0
        %v1070 = vperm.slane %v1068, 1
        %v1071 = vsel %vm648, %v1069, 0
        %v1072 = vsel %vm649, %v1070, 0
        %v1073 = vadd.s32 %v975, 1
        %v1074 = vperm.slane %v1071, 0
        %v1075 = vperm.slane %v1072, 0
        %vm1076 = vcmp.eq.s32.totalorder %v1074, %v1073
        %vm1077 = vcmp.eq.s32.totalorder %v1075, %v1073
        %v1078 = vsel %vm1076, 1, 0
        %v1079 = vsel %vm1077, 1, 0
        %v1080 = vcvt.s32.f32 %v1078
        %v1081 = vcvt.s32.f32 %v1079
        %v1082 = vld [vmem:[%s626] sm:$0xff]
        %v1083 = vadd.f32 %v1080, %v1081
        %1084 = vadd.xlane.f32.xlu0 %v1083
        %v1085 = vpop.xlane.xlu0 %1084
        %v1086 = vadd.f32 %v1082, %v1085
        %vm1087 = vcmask 7168
        %1088 = vst.msk [vmem:[%s626] sm:$0xff] %vm1087, %v1086
        %vm1089 = vcmp.eq.s32.totalorder %v975, 0
        %v1090 = vsel %vm1089, 1, 0
        %v1091 = vcvt.s32.f32 %v1090
        %v1092 = vmul.f32 %v752, %v1091
        %v1093 = vmul.f32 %v772, %v1091
        %vm1094 = vcmask 1041408
        %v1095 = vsel %vm1094, %v1092, 0.0
        %v1096 = vrot.slane %v1095, 4
        %v1097 = vadd.f32 %v1095, %v1096
        %v1098 = vrot.slane %v1097, 2
        %v1099 = vadd.f32 %v1097, %v1098
        %v1100 = vrot.slane %v1099, 1
        %v1101 = vadd.f32 %v1099, %v1100
        %v1102 = vsel %vm1094, %v1093, 0.0
        %v1103 = vrot.slane %v1102, 4
        %v1104 = vadd.f32 %v1102, %v1103
        %v1105 = vrot.slane %v1104, 2
        %v1106 = vadd.f32 %v1104, %v1105
        %v1107 = vrot.slane %v1106, 1
        %v1108 = vadd.f32 %v1106, %v1107
        %v1109 = vmul.f32 %v1080, %v1101
        %v1110 = vmul.f32 %v1081, %v1108
        %v1111 = vadd.f32 %v1109, %v1110
        %1112 = vadd.xlane.f32.xlu0 %v1111
        %v1113 = vpop.xlane.xlu0 %1112
        %vm1114 = vcmp.eq.s32.totalorder %v642, 0
        %v1115 = vsel %vm1114, 1, 0
        %v1116 = vcvt.s32.f32 %v1115
        %v1117 = vmul.f32 %v1113, %v1116
        %v1118 = vadd.f32 %v1117, 0.0
        %vm1119 = vcmp.eq.s32.totalorder %v975, 1
        %v1120 = vsel %vm1119, 1, 0
        %v1121 = vcvt.s32.f32 %v1120
        %v1122 = vmul.f32 %v752, %v1121
        %v1123 = vmul.f32 %v772, %v1121
        %v1124 = vsel %vm1094, %v1122, 0.0
        %v1125 = vrot.slane %v1124, 4
        %v1126 = vadd.f32 %v1124, %v1125
        %v1127 = vrot.slane %v1126, 2
        %v1128 = vadd.f32 %v1126, %v1127
        %v1129 = vrot.slane %v1128, 1
        %v1130 = vadd.f32 %v1128, %v1129
        %v1131 = vsel %vm1094, %v1123, 0.0
        %v1132 = vrot.slane %v1131, 4
        %v1133 = vadd.f32 %v1131, %v1132
        %v1134 = vrot.slane %v1133, 2
        %v1135 = vadd.f32 %v1133, %v1134
        %v1136 = vrot.slane %v1135, 1
        %v1137 = vadd.f32 %v1135, %v1136
        %v1138 = vmul.f32 %v1080, %v1130
        %v1139 = vmul.f32 %v1081, %v1137
        %v1140 = vadd.f32 %v1138, %v1139
        %1141 = vadd.xlane.f32.xlu0 %v1140
        %v1142 = vpop.xlane.xlu0 %1141
        %vm1143 = vcmp.eq.s32.totalorder %v642, 1
        %v1144 = vsel %vm1143, 1, 0
        %v1145 = vcvt.s32.f32 %v1144
        %v1146 = vmul.f32 %v1142, %v1145
        %v1147 = vadd.f32 %v1118, %v1146
        %v1148 = vld [vmem:[%s630] sm:$0xff]
        %v1149 = vadd.f32 %v1148, %v1147
        %vm1150 = vcmask 15360
        %1151 = vst.msk [vmem:[%s630] sm:$0xff] %vm1150, %v1149
        %v1152 = vstv %s938
        %v1153 = vmul.f32 %v1152, %v1116
        %v1154 = vstv %s952
        %v1155 = vmul.f32 %v1154, %v1145
        %v1156 = vadd.f32 %v1153, %v1155
        %vm1157 = vcmp.eq.s32.totalorder %v642, 2
        %v1158 = vsel %vm1157, 1, 0
        %v1159 = vcvt.s32.f32 %v1158
        %v1160 = vstv %s968
        %v1161 = vmul.f32 %v1160, %v1159
        %v1162 = vadd.f32 %v1156, %v1161
        %vm1163 = vcmp.eq.s32.totalorder %v642, 3
        %v1164 = vsel %vm1163, 1, 0
        %v1165 = vcvt.s32.f32 %v1164
        %v1166 = vstv %s1055
        %v1167 = vmul.f32 %v1166, %v1165
        %v1168 = vadd.f32 %v1162, %v1167
        %vm1169 = vcmp.eq.s32.totalorder %v642, 4
        %v1170 = vsel %vm1169, 1, 0
        %v1171 = vcvt.s32.f32 %v1170
        %v1172 = vstv %s1067
        %v1173 = vmul.f32 %v1172, %v1171
        %v1174 = vadd.f32 %v1168, %v1173
        %v1175 = vld [vmem:[%s572] sm:$0x1]
        %v1176 = vadd.f32 %v1175, %v1174
        %vm1177 = vcmask 57344
        %1178 = vst.msk [vmem:[%s572] sm:$0x1] %vm1177, %v1176
        %s1179 = sand.u32 %s295, 1
        %s1180 = scalar_lea.sflag [#allocation5], %s1179
        %s1181 = sand.u32 %s295, 1
        %s1182 = smul.addr %s1181, 2
        %s1183 = scalar_lea.vmem [#allocation8], %s1182
        %s1184 = sand.u32 %s321, 1
        %s1185 = scalar_lea.sflag [#allocation10], %s1184
        %s1186 = sand.u32 %s321, 1
        %s1187 = scalar_lea.vmem [#allocation9], %s1186
        %p1188 = scmp.lt.s32.totalorder %s39, 1
        %s1189 = scalar_select %p1188, %s39, 1
        %s1190 = smul.addr %s1189, 8
        %s1191 = scalar_lea.vmem %s12, %s1190
        %p1192 = scmp.lt.s32.totalorder %s39, 1
        %s1193 = scalar_select %p1192, %s39, 1
        %s1194 = smul.addr %s1193, 8
        %s1195 = scalar_lea.vmem %s13, %s1194
        // Predicated region
        $region73: #{tpu_custom_call.1} parent=59 // pred_check
          %p1196 = pneg %p305
        $region74: #{tpu_custom_call.1} parent=59 // pred_check_branch
          %1198 = sbr.rel (%p1196) target = $region76
        $region75: #{tpu_custom_call.1} parent=59 // pred_region
          %s1199 = smul.u32 2, %s40
          %1201 = vsyncadd %s1180, 0
          %s1202 = smul.addr %s39, 2
          %s1203 = sadd.s32 %s1199, %s1202
          %s1204 = scalar_lea.hbm %s10, %s1203
          %s1206 = sshll.u32 %s1183, 4
          %s1207 = int_to_ptr.vmem [resolvable:$true] %s1206
          %s1208 = sshll.u32 %s1204, 4
          %s1209 = int_to_ptr.hbm [resolvable:$true] %s1208
          %1211 = dma.vmem_to_hbm [thread:$0]  %s1207, 32, %s1209, %s1180
        $region76: #{tpu_custom_call.1} parent=59 // pred_fallthru
          _
        // Predicated region
        $region77: #{tpu_custom_call.1} parent=59 // pred_check
          %p1212 = pneg %p331
        $region78: #{tpu_custom_call.1} parent=59 // pred_check_branch
          %1214 = sbr.rel (%p1212) target = $region80
        $region79: #{tpu_custom_call.1} parent=59 // pred_region
          %1216 = vsyncadd %s1185, 0
          %s1217 = scalar_lea.hbm %s11, %s39
          %s1219 = sshll.u32 %s1187, 4
          %s1220 = int_to_ptr.vmem [resolvable:$true] %s1219
          %s1221 = sshll.u32 %s1217, 4
          %s1222 = int_to_ptr.hbm [resolvable:$true] %s1221
          %1224 = dma.vmem_to_hbm [thread:$0]  %s1220, 16, %s1222, %s1185
        $region80: #{tpu_custom_call.1} parent=59 // pred_fallthru
          _
        // Predicated region
        $region81: #{tpu_custom_call.1} parent=59 // pred_check
          %p1225 = pneg %p357
        $region82: #{tpu_custom_call.1} parent=59 // pred_check_branch
          %1227 = sbr.rel (%p1225) target = $region84
        $region83: #{tpu_custom_call.1} parent=59 // pred_region
          _
        $region84: #{tpu_custom_call.1} parent=59 // pred_fallthru
          _
        // Predicated region
        $region85: #{tpu_custom_call.1} parent=59 // pred_check
          %p1228 = pneg %p383
        $region86: #{tpu_custom_call.1} parent=59 // pred_check_branch
          %1230 = sbr.rel (%p1228) target = $region88
        $region87: #{tpu_custom_call.1} parent=59 // pred_region
          _
        $region88: #{tpu_custom_call.1} parent=59 // pred_fallthru
          _
      $region60: #{tpu_custom_call.1} parent=5 // pred_fallthru
        _
      %p1231 = scmp.le.s32.totalorder 2, %s30
      // Predicated region
      $region89: #{tpu_custom_call.1} parent=5 // pred_check
        %p1232 = pneg %p1231
      $region90: #{tpu_custom_call.1} parent=5 // pred_check_branch
        %1234 = sbr.rel (%p1232) target = $region92
      $region91: #{tpu_custom_call.1} parent=5 // pred_region
        %s1235 = ssub.s32 %s30, 2
        // Predicated region
        $region93: #{tpu_custom_call.1} parent=91 // pred_check
          %p1236 = pneg %p311
        $region94: #{tpu_custom_call.1} parent=91 // pred_check_branch
          %1238 = sbr.rel (%p1236) target = $region96
        $region95: #{tpu_custom_call.1} parent=91 // pred_region
          %s1239 = sand.u32 %s296, 1
          %s1240 = scalar_lea.sflag [#allocation5], %s1239
          %s1241 = sand.u32 %s296, 1
          %s1242 = smul.addr %s1241, 2
          %s1243 = scalar_lea.vmem [#allocation8], %s1242
          %1245 = dma.done %s1240, 32
        $region96: #{tpu_custom_call.1} parent=91 // pred_fallthru
          _
        // Predicated region
        $region97: #{tpu_custom_call.1} parent=91 // pred_check
          %p1246 = pneg %p337
        $region98: #{tpu_custom_call.1} parent=91 // pred_check_branch
          %1248 = sbr.rel (%p1246) target = $region100
        $region99: #{tpu_custom_call.1} parent=91 // pred_region
          %s1249 = sand.u32 %s322, 1
          %s1250 = scalar_lea.sflag [#allocation10], %s1249
          %s1251 = sand.u32 %s322, 1
          %s1252 = scalar_lea.vmem [#allocation9], %s1251
          %1254 = dma.done %s1250, 16
        $region100: #{tpu_custom_call.1} parent=91 // pred_fallthru
          _
        // Predicated region
        $region101: #{tpu_custom_call.1} parent=91 // pred_check
          %p1255 = pneg %p363
        $region102: #{tpu_custom_call.1} parent=91 // pred_check_branch
          %1257 = sbr.rel (%p1255) target = $region104
        $region103: #{tpu_custom_call.1} parent=91 // pred_region
          %p1258 = scmp.lt.s32.totalorder %s41, 1
          %s1259 = scalar_select %p1258, %s41, 1
          %s1260 = smul.addr %s1259, 8
          %s1261 = scalar_lea.vmem %s12, %s1260
        $region104: #{tpu_custom_call.1} parent=91 // pred_fallthru
          _
        // Predicated region
        $region105: #{tpu_custom_call.1} parent=91 // pred_check
          %p1262 = pneg %p389
        $region106: #{tpu_custom_call.1} parent=91 // pred_check_branch
          %1264 = sbr.rel (%p1262) target = $region108
        $region107: #{tpu_custom_call.1} parent=91 // pred_region
          %p1265 = scmp.lt.s32.totalorder %s41, 1
          %s1266 = scalar_select %p1265, %s41, 1
          %s1267 = smul.addr %s1266, 8
          %s1268 = scalar_lea.vmem %s13, %s1267
        $region108: #{tpu_custom_call.1} parent=91 // pred_fallthru
          _
      $region92: #{tpu_custom_call.1} parent=5 // pred_fallthru
        _
    $region6: #{tpu_custom_call.1} parent=1 // loop_footer
      %s34 = sadd.s32 1, %s30
    $region7: #{tpu_custom_call.1} parent=1 // loop_footer_branch
      %29 = sbr.rel target = $region3
    $region8: #{tpu_custom_call.1} parent=1 // loop_exit
      _
    %1269 = vsyncpa [#allocation4], 1
    %s1270 = scalar_lea.sflag [#allocation4], 1
    %1271 = vsyncpa %s1270, 1
    %1272 = vsyncpa [#allocation7], 1
    %1273 = vsyncpa [#allocation5], 1
    %s1274 = scalar_lea.sflag [#allocation5], 1
    %1275 = vsyncpa %s1274, 1
    %1276 = vsyncpa [#allocation10], 1
    %s1277 = scalar_lea.sflag [#allocation10], 1
    %1278 = vsyncpa %s1277, 1

</llo_original>
